<compile_context>
chip_gen: v5e
topology: v5e:2x2
jax: 0.10.0
libtpu: 0.0.40
codegen_flags: <defaults>
</compile_context>

<pallas_src>
import math
import jax
import jax.numpy as jnp
from jax.experimental import pallas as pl
from jax.experimental.pallas import tpu as pltpu


# --------------------------------------------------------------------------
# Kernel
# --------------------------------------------------------------------------
def sae_kernel(xb_ref, w_enc_ref, b_enc_ref, w_dec_ref, b_dec_ref,
               recon_ref, z_ref):
    """One (batch-tile i, latent-tile l) grid step.

    xb_ref:    (tm, D)  bf16  (x - b_dec) tile, pre-computed in the wrapper
    w_enc_ref: (D,  tl) bf16  encoder weight slab (contiguous in HBM)
    b_enc_ref: (1,  tl) f32   encoder bias slice
    w_dec_ref: (tl, D)  bf16  decoder weight slab
    b_dec_ref: (1,  D)  f32   decoder bias (constant across grid)
    recon_ref: (tm, D)  f32   reconstruction tile, resident across l (accum)
    z_ref:     (tm, tl)       latent tile
    """
    l = pl.program_id(1)

    # Seed the resident recon accumulator with the decoder bias once per
    # batch tile (the recon block index is constant in l).
    @pl.when(l == 0)
    def _():
        recon_ref[...] = jnp.broadcast_to(
            b_dec_ref[...], recon_ref.shape).astype(recon_ref.dtype)

    # ---- encode this latent slice: (tm, D) @ (D, tl), f32 accumulation ----
    lin = jnp.dot(xb_ref[...], w_enc_ref[...],
                  preferred_element_type=jnp.float32) + b_enc_ref[...]
    z = jnp.maximum(lin, 0.0)                      # ReLU in f32 on the VPU
    z_ref[...] = z.astype(z_ref.dtype)

    # ---- decode: accumulate this latent slice's contribution ----
    z_bf = z.astype(w_dec_ref.dtype)
    recon_ref[...] += jnp.dot(z_bf, w_dec_ref[...],
                              preferred_element_type=jnp.float32)


# --------------------------------------------------------------------------
# Helpers
# --------------------------------------------------------------------------
def _round_up(x, m):
    return ((x + m - 1) // m) * m


def _vmem_capacity_bytes():
    try:
        return int(pltpu.get_tpu_info().vmem_capacity_bytes)
    except Exception:
        return 64 * 1024 * 1024    # conservative: works on every generation


def _pick_tiles(B, D, L, tile_budget, tm_max, tl_max):
    """Pick (tm, tl): largest batch tile that fits the VMEM budget, then the
    largest 128-multiple latent tile dividing L."""
    b_cap = max(8, _round_up(B, 8))
    tl_top = max(128, min(tl_max, L))
    tl_cands = [t for t in range((tl_top // 128) * 128, 0, -128) if L % t == 0]
    if not tl_cands:
        tl_cands = [L]

    best = None
    for tl in tl_cands:
        # Double-buffered block footprint (bytes).
        fixed = 2 * D * tl * 2          # W_enc slab (bf16)
        fixed += 2 * tl * D * 2         # W_dec slab (bf16)
        fixed += 2 * 8 * tl * 4 + 2 * 8 * D * 4     # padded bias blocks
        per_tm = 2 * D * 2 + 2 * D * 4 + 2 * tl * 2  # x(bf16)+recon(f32)+z(bf16)
        avail = tile_budget - fixed
        if avail <= 0:
            continue
        tm = int(min(tm_max, b_cap, avail // per_tm))
        if tm < 8:
            continue
        tm = (tm // 256) * 256 if tm >= 256 else (tm // 8) * 8
        cand = (tm, tl)
        if best is None or cand > best:
            best = cand

    if best is None:
        # TODO(synk): for very large D the full-D blocks do not fit VMEM; a
        # third grid axis tiling D (encode K-dim + decode N-dim) is needed.
        best = (8, tl_cands[-1])
    return best


# --------------------------------------------------------------------------
# Wrapper
# --------------------------------------------------------------------------
def sae_forward(x, w_enc, b_enc, w_dec, b_dec, *, tm_max=1024, tl_max=1024,
                latent_dtype=jnp.bfloat16):
    """Fused SAE forward: returns (recon_x [f32], z_latents [latent_dtype])."""
    B, D = x.shape
    L = w_enc.shape[1]
    assert w_enc.shape == (D, L)
    assert w_dec.shape == (L, D)
    assert b_enc.shape[-1] == L and b_dec.shape[-1] == D

    # --- pad the latent dim to a lane multiple (padded cols contribute 0) ---
    L_pad = _round_up(L, 128)
    w_enc_f = w_enc.astype(jnp.float32)
    b_enc_f = b_enc.reshape(1, L).astype(jnp.float32)
    w_dec_f = w_dec.astype(jnp.float32)
    if L_pad != L:
        w_enc_f = jnp.pad(w_enc_f, ((0, 0), (0, L_pad - L)))
        b_enc_f = jnp.pad(b_enc_f, ((0, 0), (0, L_pad - L)))
        w_dec_f = jnp.pad(w_dec_f, ((0, L_pad - L), (0, 0)))

    # --- VMEM budget / tile selection (generation-aware) ---
    vmem_cap = _vmem_capacity_bytes()
    tile_budget = int(vmem_cap * 0.70)
    vmem_limit = int(vmem_cap * 0.85)
    tm, tl = _pick_tiles(B, D, L_pad, tile_budget, tm_max, tl_max)
    n_l = L_pad // tl

    # --- weight / bias prep: bf16 MXU operands, contiguous W_enc slabs ---
    w_enc_t = jnp.transpose(
        w_enc_f.reshape(D, n_l, tl), (1, 0, 2)).astype(jnp.bfloat16)   # (n_l, D, tl)
    w_dec_bf = w_dec_f.astype(jnp.bfloat16)                            # (L_pad, D)
    b_dec2 = b_dec.reshape(1, D).astype(jnp.float32)

    # --- x prep: subtract decoder bias once in f32, cast to bf16, pad batch ---
    xb = (x.astype(jnp.float32) - b_dec2).astype(jnp.bfloat16)
    b_pad = _round_up(B, tm)
    if b_pad != B:
        xb = jnp.pad(xb, ((0, b_pad - B), (0, 0)))

    grid = (b_pad // tm, n_l)

    z_bytes = jnp.dtype(latent_dtype).itemsize
    cost = pl.CostEstimate(
        flops=4 * b_pad * D * L_pad,
        transcendentals=0,
        bytes_accessed=int((2 * D * L_pad * 2) * grid[0]      # weight streaming
                           + b_pad * D * 2                    # x read (bf16)
                           + b_pad * D * 4                    # recon write (f32)
                           + b_pad * L_pad * z_bytes),        # z write
    )

    recon, z = pl.pallas_call(
        sae_kernel,
        out_shape=(
            jax.ShapeDtypeStruct((b_pad, D), jnp.float32),       # recon_x
            jax.ShapeDtypeStruct((b_pad, L_pad), latent_dtype),  # z_latents
        ),
        grid_spec=pltpu.PrefetchScalarGridSpec(
            num_scalar_prefetch=0,
            grid=grid,
            in_specs=[
                pl.BlockSpec((tm, D), lambda i, l: (i, 0)),        # x - b_dec
                pl.BlockSpec((None, D, tl), lambda i, l: (l, 0, 0)),  # W_enc slab
                pl.BlockSpec((1, tl), lambda i, l: (0, l)),        # b_enc slice
                pl.BlockSpec((tl, D), lambda i, l: (l, 0)),        # W_dec slab
                pl.BlockSpec((1, D), lambda i, l: (0, 0)),         # b_dec
            ],
            out_specs=[
                pl.BlockSpec((tm, D), lambda i, l: (i, 0)),    # recon (resident in l)
                pl.BlockSpec((tm, tl), lambda i, l: (i, l)),   # z tile
            ],
        ),
        compiler_params=pltpu.CompilerParams(
            dimension_semantics=("parallel", "arbitrary"),
            vmem_limit_bytes=vmem_limit,
        ),
        cost_estimate=cost,
    )(xb, w_enc_t, b_enc_f, w_dec_bf, b_dec2)

    recon = recon[:B]
    z = z[:B, :L]
    return recon, z


# --------------------------------------------------------------------------
# Parameter init (mirrors the PyTorch module) and pure-JAX reference
# --------------------------------------------------------------------------
def init_params(key, acts_dim, latent_dim):
    k_enc, k_dec = jax.random.split(key)

    def kaiming_uniform(k, shape):
        fan_in = shape[1]
        bound = math.sqrt(2.0) * math.sqrt(3.0 / fan_in)
        return jax.random.uniform(k, shape, jnp.float32, -bound, bound)

    w_enc = kaiming_uniform(k_enc, (acts_dim, latent_dim))
    b_enc = jnp.zeros((latent_dim,), jnp.float32)
    w_dec = kaiming_uniform(k_dec, (latent_dim, acts_dim))
    w_dec = w_dec / jnp.linalg.norm(w_dec, axis=-1, keepdims=True)
    b_dec = jnp.zeros((acts_dim,), jnp.float32)
    return w_enc, b_enc, w_dec, b_dec


def sae_reference(x, w_enc, b_enc, w_dec, b_dec):
    """Pure-JAX (f32) reference of the PyTorch forward()."""
    x_bias = x - b_dec
    z = jax.nn.relu(x_bias @ w_enc + b_enc)
    recon = z @ w_dec + b_dec
    return recon, z


# TODO(synk): remove_parallel_gradients() is a training-time gradient hook,
# not part of forward(); it is intentionally not implemented as a kernel.

if __name__ == "__main__":
    # Small shapes consistent with the module (acts_dim x exp latent space).
    batch = 50                # non-multiple of the batch tile -> exercises padding
    acts_dim = 256
    exp = 4
    latent_dim = acts_dim * exp

    key = jax.random.PRNGKey(0)
    k_x, k_p = jax.random.split(key)

    x = jax.random.normal(k_x, (batch, acts_dim), jnp.float32)
    w_enc, b_enc, w_dec, b_dec = init_params(k_p, acts_dim, latent_dim)

    recon, z = sae_forward(x, w_enc, b_enc, w_dec, b_dec)
    jax.block_until_ready((recon, z))

    recon_ref, z_ref = sae_reference(x, w_enc, b_enc, w_dec, b_dec)
    assert recon.shape == (batch, acts_dim)
    assert z.shape == (batch, latent_dim)
    # bf16 MXU inputs / bf16 z storage with f32 accumulation: relaxed tolerances.
    assert jnp.allclose(recon, recon_ref, atol=5e-2, rtol=5e-2)
    assert jnp.allclose(z.astype(jnp.float32), z_ref, atol=5e-2, rtol=5e-2)

    print("KERNEL_OK")
</pallas_src>

<mosaic_0001>
module attributes {stable_mosaic.version = 11 : i64} {
  func.func @sae_kernel(%arg0: i32, %arg1: i32, %arg2: memref<56x256xbf16, #tpu.memory_space<vmem>>, %arg3: memref<1x256x1024xbf16, #tpu.memory_space<vmem>>, %arg4: memref<1x1024xf32, #tpu.memory_space<vmem>>, %arg5: memref<1024x256xbf16, #tpu.memory_space<vmem>>, %arg6: memref<1x256xf32, #tpu.memory_space<vmem>>, %arg7: memref<56x256xf32, #tpu.memory_space<vmem>>, %arg8: memref<56x1024xbf16, #tpu.memory_space<vmem>>) attributes {dimension_semantics = [#tpu.dimension_semantics<parallel>, #tpu.dimension_semantics<arbitrary>], iteration_bounds = array<i64: 1, 1>, scalar_prefetch = 0 : i64, scratch_operands = 0 : i64, tpu.core_type = #tpu.core_type<tc>, window_params = [{transform_indices = @transform_0, window_bounds = array<i64: 56, 256>}, {transform_indices = @transform_1, window_bounds = array<i64: 1, 256, 1024>}, {transform_indices = @transform_2, window_bounds = array<i64: 1, 1024>}, {transform_indices = @transform_3, window_bounds = array<i64: 1024, 256>}, {pipeline_mode = #tpu.pipeline_mode<synchronous>, transform_indices = @transform_4, window_bounds = array<i64: 1, 256>}, {transform_indices = @transform_5, window_bounds = array<i64: 56, 256>}, {transform_indices = @transform_6, window_bounds = array<i64: 56, 1024>}]} {
    %c0_i32 = arith.constant 0 : i32
    %0 = arith.cmpi eq, %arg1, %c0_i32 : i32
    %1 = arith.extui %0 : i1 to i32
    %c0_i32_0 = arith.constant 0 : i32
    %2 = arith.cmpi ne, %1, %c0_i32_0 : i32
    scf.if %2 {
      %c0_17 = arith.constant 0 : index
      %c0_18 = arith.constant 0 : index
      %20 = vector.load %arg6[%c0_17, %c0_18] : memref<1x256xf32, #tpu.memory_space<vmem>>, vector<1x256xf32>
      %21 = vector.shape_cast %20 : vector<1x256xf32> to vector<1x256xf32>
      %22 = vector.broadcast %21 : vector<1x256xf32> to vector<56x256xf32>
      %c0_19 = arith.constant 0 : index
      %c0_20 = arith.constant 0 : index
      %23 = vector.load %arg7[%c0_19, %c0_20] : memref<56x256xf32, #tpu.memory_space<vmem>>, vector<56x256xf32>
      tpu.vector_store %arg7[%c0_19, %c0_20], %22 {strides = array<i32>} : memref<56x256xf32, #tpu.memory_space<vmem>>, vector<56x256xf32>,
    } else {
    }
    %c0 = arith.constant 0 : index
    %c0_1 = arith.constant 0 : index
    %3 = vector.load %arg2[%c0, %c0_1] : memref<56x256xbf16, #tpu.memory_space<vmem>>, vector<56x256xbf16>
    %c0_2 = arith.constant 0 : index
    %c0_3 = arith.constant 0 : index
    %c0_4 = arith.constant 0 : index
    %4 = vector.load %arg3[%c0_2, %c0_3, %c0_4] : memref<1x256x1024xbf16, #tpu.memory_space<vmem>>, vector<1x256x1024xbf16>
    %5 = vector.shape_cast %4 : vector<1x256x1024xbf16> to vector<256x1024xbf16>
    %cst = arith.constant dense<0.000000e+00> : vector<56x1024xf32>
    %6 = tpu.matmul %3, %5, %cst {dimension_numbers = #tpu.dot_dimension_numbers<[1], [0], [0], [1], [0, 0, 1, 1], [], []>} : vector<56x256xbf16>, vector<256x1024xbf16>, vector<56x1024xf32> -> vector<56x1024xf32>
    %c0_5 = arith.constant 0 : index
    %c0_6 = arith.constant 0 : index
    %7 = vector.load %arg4[%c0_5, %c0_6] : memref<1x1024xf32, #tpu.memory_space<vmem>>, vector<1x1024xf32>
    %8 = vector.broadcast %7 : vector<1x1024xf32> to vector<56x1024xf32>
    %9 = arith.addf %6, %8 : vector<56x1024xf32>
    %cst_7 = arith.constant 0.000000e+00 : f32
    %10 = vector.broadcast %cst_7 : f32 to vector<56x1024xf32>
    %11 = arith.maximumf %9, %10 : vector<56x1024xf32>
    %12 = arith.truncf %11 : vector<56x1024xf32> to vector<56x1024xbf16>
    %c0_8 = arith.constant 0 : index
    %c0_9 = arith.constant 0 : index
    %13 = vector.load %arg8[%c0_8, %c0_9] : memref<56x1024xbf16, #tpu.memory_space<vmem>>, vector<56x1024xbf16>
    tpu.vector_store %arg8[%c0_8, %c0_9], %12 {strides = array<i32>} : memref<56x1024xbf16, #tpu.memory_space<vmem>>, vector<56x1024xbf16>,
    %14 = arith.truncf %11 : vector<56x1024xf32> to vector<56x1024xbf16>
    %c0_10 = arith.constant 0 : index
    %c0_11 = arith.constant 0 : index
    %15 = vector.load %arg7[%c0_10, %c0_11] : memref<56x256xf32, #tpu.memory_space<vmem>>, vector<56x256xf32>
    %c0_12 = arith.constant 0 : index
    %c0_13 = arith.constant 0 : index
    %16 = vector.load %arg5[%c0_12, %c0_13] : memref<1024x256xbf16, #tpu.memory_space<vmem>>, vector<1024x256xbf16>
    %cst_14 = arith.constant dense<0.000000e+00> : vector<56x256xf32>
    %17 = tpu.matmul %14, %16, %cst_14 {dimension_numbers = #tpu.dot_dimension_numbers<[1], [0], [0], [1], [0, 0, 1, 1], [], []>} : vector<56x1024xbf16>, vector<1024x256xbf16>, vector<56x256xf32> -> vector<56x256xf32>
    %18 = arith.addf %15, %17 : vector<56x256xf32>
    %c0_15 = arith.constant 0 : index
    %c0_16 = arith.constant 0 : index
    %19 = vector.load %arg7[%c0_15, %c0_16] : memref<56x256xf32, #tpu.memory_space<vmem>>, vector<56x256xf32>
    tpu.vector_store %arg7[%c0_15, %c0_16], %18 {strides = array<i32>} : memref<56x256xf32, #tpu.memory_space<vmem>>, vector<56x256xf32>,
    return
  }
  func.func @transform_0(%arg0: i32, %arg1: i32) -> (i32, i32) {
    %c0_i32 = arith.constant 0 : i32
    %c0_i32_0 = arith.constant 0 : i32
    return %arg0, %c0_i32 : i32, i32
  }
  func.func @transform_1(%arg0: i32, %arg1: i32) -> (i32, i32, i32) {
    %c0_i32 = arith.constant 0 : i32
    %c0_i32_0 = arith.constant 0 : i32
    %c0_i32_1 = arith.constant 0 : i32
    return %arg1, %c0_i32, %c0_i32_0 : i32, i32, i32
  }
  func.func @transform_2(%arg0: i32, %arg1: i32) -> (i32, i32) {
    %c0_i32 = arith.constant 0 : i32
    %c0_i32_0 = arith.constant 0 : i32
    return %c0_i32, %arg1 : i32, i32
  }
  func.func @transform_3(%arg0: i32, %arg1: i32) -> (i32, i32) {
    %c0_i32 = arith.constant 0 : i32
    %c0_i32_0 = arith.constant 0 : i32
    return %arg1, %c0_i32 : i32, i32
  }
  func.func @transform_4(%arg0: i32, %arg1: i32) -> (i32, i32) {
    %c0_i32 = arith.constant 0 : i32
    %c0_i32_0 = arith.constant 0 : i32
    %c0_i32_1 = arith.constant 0 : i32
    return %c0_i32, %c0_i32_0 : i32, i32
  }
  func.func @transform_5(%arg0: i32, %arg1: i32) -> (i32, i32) {
    %c0_i32 = arith.constant 0 : i32
    %c0_i32_0 = arith.constant 0 : i32
    return %arg0, %c0_i32 : i32, i32
  }
  func.func @transform_6(%arg0: i32, %arg1: i32) -> (i32, i32) {
    %c0_i32 = arith.constant 0 : i32
    return %arg0, %arg1 : i32, i32
  }
}

</mosaic_0001>

<llo_original>
// kernel: tpu_custom_call.1
$region0: #{tpu_custom_call.1}
  #allocation0 [shape = 'u32[]', space=smem, size = 0x4, offset = 0x4, fixed_abs, tag = 'smem constant byte address 0x4 - core index']
  #allocation1 [shape = 'u32[72,128]{1,0:T(1,128)}', space=vmem, size = 0x9000, scoped, tag = 'internal scratch']
  %s0 = inlined_call_operand.hbm [shape: bf16[56,256], index: 0, kind: input, shape index: {}]
  %s1 = inlined_call_operand.hbm [shape: bf16[1,256,1024], index: 1, kind: input, shape index: {}]
  %s2 = inlined_call_operand.hbm [shape: f32[1,1024], index: 2, kind: input, shape index: {}]
  %s3 = inlined_call_operand.hbm [shape: bf16[1024,256], index: 3, kind: input, shape index: {}]
  %s4 = inlined_call_operand.vmem [shape: f32[1,256], index: 4, kind: input, shape index: {}]
  %s5 = inlined_call_operand.hbm [shape: f32[56,256], index: 5, kind: output, shape index: {0}]
  %s6 = inlined_call_operand.hbm [shape: bf16[56,1024], index: 6, kind: output, shape index: {1}]
  %7 = xla_tuple %s5, %s6
  %s8 = sld [smem:[#allocation0]]
  $region58: #{tpu_custom_call.1} parent=0
    _
  %s10 = ssub.s32 1, %s8
  %s11 = scalar_select 0, %s10, %s8
  $region1: #{tpu_custom_call.1} parent=0
    #allocation2 [shape = 'u8[28672]{0}', space=vmem, size = 0x7000, scoped, tag = 'input window, operand 0, single buffered']
    #allocation3 [shape = 's32[1]{0}', space=sflag, size = 0x4, scoped, tag = 'scoped memory for tpu_custom_call.1']
    #allocation4 [shape = 's32[1]{0}', space=sflag, size = 0x4, scoped, tag = 'scoped memory for tpu_custom_call.1']
    #allocation5 [shape = 'u8[524288]{0}', space=vmem, size = 0x80000, scoped, tag = 'input window, operand 1, single buffered']
    #allocation6 [shape = 's32[1]{0}', space=sflag, size = 0x4, scoped, tag = 'scoped memory for tpu_custom_call.1']
    #allocation7 [shape = 'u8[4096]{0}', space=vmem, size = 0x1000, scoped, tag = 'input window, operand 2, single buffered']
    #allocation8 [shape = 'u8[524288]{0}', space=vmem, size = 0x80000, scoped, tag = 'input window, operand 3, single buffered']
    #allocation9 [shape = 's32[1]{0}', space=sflag, size = 0x4, scoped, tag = 'scoped memory for tpu_custom_call.1']
    #allocation10 [shape = 'u8[57344]{0}', space=vmem, size = 0xe000, scoped, tag = 'output window, operand 0, single buffered']
    #allocation11 [shape = 'u8[114688]{0}', space=vmem, size = 0x1c000, scoped, tag = 'output window, operand 1, single buffered']
    #allocation12 [shape = 's32[1]{0}', space=sflag, size = 0x4, scoped, tag = 'scoped memory for tpu_custom_call.1']
    %12 = vsyncpa [#allocation3], 0
    %13 = vsyncpa [#allocation6], 0
    %14 = vsyncpa [#allocation9], 0
    %15 = vsyncpa [#allocation4], 0
    %16 = vsyncpa [#allocation12], 0
    // Predicated region
    $region2: #{tpu_custom_call.1} parent=1 // pred_check
      _
    $region3: #{tpu_custom_call.1} parent=1 // pred_check_branch
      %18 = sbr.rel (0) target = $region5
    $region4: #{tpu_custom_call.1} parent=1 // pred_region
      %20 = vsyncadd [#allocation3], 0
      %s21 = sshll.u32 %s0, 4
      %s22 = int_to_ptr.hbm [resolvable:$true] %s21
      %s23 = sshll.u32 [#allocation2], 4
      %s24 = int_to_ptr.vmem [resolvable:$true] %s23
      %29 = dma.hbm_to_vmem [thread:$0]  %s22, 896, %s24, [#allocation3], 128, 128, 8
    $region5: #{tpu_custom_call.1} parent=1 // pred_fallthru
      _
    // Predicated region
    $region6: #{tpu_custom_call.1} parent=1 // pred_check
      _
    $region7: #{tpu_custom_call.1} parent=1 // pred_check_branch
      %31 = sbr.rel (0) target = $region9
    $region8: #{tpu_custom_call.1} parent=1 // pred_region
      %33 = vsyncadd [#allocation6], 0
      %s34 = sshll.u32 %s1, 4
      %s35 = int_to_ptr.hbm [resolvable:$true] %s34
      %s36 = sshll.u32 [#allocation5], 4
      %s37 = int_to_ptr.vmem [resolvable:$true] %s36
      %42 = dma.hbm_to_vmem [thread:$0]  %s35, 16384, %s37, [#allocation6], 512, 512, 32
    $region9: #{tpu_custom_call.1} parent=1 // pred_fallthru
      _
    // Predicated region
    $region10: #{tpu_custom_call.1} parent=1 // pred_check
      _
    $region11: #{tpu_custom_call.1} parent=1 // pred_check_branch
      %44 = sbr.rel (0) target = $region13
    $region12: #{tpu_custom_call.1} parent=1 // pred_region
      %46 = vsyncadd [#allocation6], 0
      %s48 = sshll.u32 %s2, 4
      %s49 = int_to_ptr.hbm [resolvable:$true] %s48
      %s50 = sshll.u32 [#allocation7], 4
      %s51 = int_to_ptr.vmem [resolvable:$true] %s50
      %53 = dma.hbm_to_vmem [thread:$0]  %s49, 128, %s51, [#allocation6]
    $region13: #{tpu_custom_call.1} parent=1 // pred_fallthru
      _
    // Predicated region
    $region14: #{tpu_custom_call.1} parent=1 // pred_check
      _
    $region15: #{tpu_custom_call.1} parent=1 // pred_check_branch
      %55 = sbr.rel (0) target = $region17
    $region16: #{tpu_custom_call.1} parent=1 // pred_region
      %57 = vsyncadd [#allocation9], 0
      %s58 = sshll.u32 %s3, 4
      %s59 = int_to_ptr.hbm [resolvable:$true] %s58
      %s60 = sshll.u32 [#allocation8], 4
      %s61 = int_to_ptr.vmem [resolvable:$true] %s60
      %66 = dma.hbm_to_vmem [thread:$0]  %s59, 16384, %s61, [#allocation9], 128, 128, 8
    $region17: #{tpu_custom_call.1} parent=1 // pred_fallthru
      _
    // Predicated region
    $region18: #{tpu_custom_call.1} parent=1 // pred_check
      _
    $region19: #{tpu_custom_call.1} parent=1 // pred_check_branch
      %68 = sbr.rel (0) target = $region21
    $region20: #{tpu_custom_call.1} parent=1 // pred_region
      _
    $region21: #{tpu_custom_call.1} parent=1 // pred_fallthru
      _
    // Predicated region
    $region22: #{tpu_custom_call.1} parent=1 // pred_check
      _
    $region23: #{tpu_custom_call.1} parent=1 // pred_check_branch
      %70 = sbr.rel (0) target = $region25
    $region24: #{tpu_custom_call.1} parent=1 // pred_region
      %72 = dma.done [#allocation3], 896
    $region25: #{tpu_custom_call.1} parent=1 // pred_fallthru
      _
    // Predicated region
    $region26: #{tpu_custom_call.1} parent=1 // pred_check
      _
    $region27: #{tpu_custom_call.1} parent=1 // pred_check_branch
      %74 = sbr.rel (0) target = $region29
    $region28: #{tpu_custom_call.1} parent=1 // pred_region
      %76 = dma.done [#allocation6], 16384
    $region29: #{tpu_custom_call.1} parent=1 // pred_fallthru
      _
    // Predicated region
    $region30: #{tpu_custom_call.1} parent=1 // pred_check
      _
    $region31: #{tpu_custom_call.1} parent=1 // pred_check_branch
      %78 = sbr.rel (0) target = $region33
    $region32: #{tpu_custom_call.1} parent=1 // pred_region
      %80 = dma.done [#allocation6], 128
    $region33: #{tpu_custom_call.1} parent=1 // pred_fallthru
      _
    // Predicated region
    $region34: #{tpu_custom_call.1} parent=1 // pred_check
      _
    $region35: #{tpu_custom_call.1} parent=1 // pred_check_branch
      %82 = sbr.rel (0) target = $region37
    $region36: #{tpu_custom_call.1} parent=1 // pred_region
      %84 = dma.done [#allocation9], 16384
    $region37: #{tpu_custom_call.1} parent=1 // pred_fallthru
      _
    %p85 = scmp.eq.s32.totalorder 0, 0
    // Predicated region
    $region38: #{tpu_custom_call.1} parent=1 // pred_check
      %p86 = pneg %p85
    $region39: #{tpu_custom_call.1} parent=1 // pred_check_branch
      %88 = sbr.rel (%p86) target = $region41
    $region40: #{tpu_custom_call.1} parent=1 // pred_region
      %v89 = vld [vmem:[%s4] sm:$0x3]
      %v91 = vperm.slane %v89, 0
      %v92 = vperm.slane %v89, 1
      %95 = vst [vmem:[#allocation10] sm:$0xff] %v91
      %96 = vst [vmem:[#allocation10 + $0x8] sm:$0xff] %v92
      %97 = vst [vmem:[#allocation10 + $0x10] sm:$0xff] %v91
      %98 = vst [vmem:[#allocation10 + $0x18] sm:$0xff] %v92
      %99 = vst [vmem:[#allocation10 + $0x20] sm:$0xff] %v91
      %100 = vst [vmem:[#allocation10 + $0x28] sm:$0xff] %v92
      %101 = vst [vmem:[#allocation10 + $0x30] sm:$0xff] %v91
      %102 = vst [vmem:[#allocation10 + $0x38] sm:$0xff] %v92
      %103 = vst [vmem:[#allocation10 + $0x40] sm:$0xff] %v91
      %104 = vst [vmem:[#allocation10 + $0x48] sm:$0xff] %v92
      %105 = vst [vmem:[#allocation10 + $0x50] sm:$0xff] %v91
      %106 = vst [vmem:[#allocation10 + $0x58] sm:$0xff] %v92
      %107 = vst [vmem:[#allocation10 + $0x60] sm:$0xff] %v91
      %108 = vst [vmem:[#allocation10 + $0x68] sm:$0xff] %v92
    $region41: #{tpu_custom_call.1} parent=1 // pred_fallthru
      _
    %v109 = vld [vmem:[#allocation2] sm:$0xff]
    %v110 = vld [vmem:[#allocation2 + $0x8] sm:$0xff]
    %v111 = vld [vmem:[#allocation2 + $0x10] sm:$0xff]
    %v112 = vld [vmem:[#allocation2 + $0x18] sm:$0xff]
    %v113 = vld [vmem:[#allocation2 + $0x20] sm:$0xff]
    %v114 = vld [vmem:[#allocation2 + $0x28] sm:$0xff]
    %v115 = vld [vmem:[#allocation2 + $0x30] sm:$0xff]
    %v116 = vld [vmem:[#allocation5] sm:$0xff]
    %v117 = vld [vmem:[#allocation5 + $0x8] sm:$0xff]
    %v118 = vld [vmem:[#allocation5 + $0x10] sm:$0xff]
    %v119 = vld [vmem:[#allocation5 + $0x18] sm:$0xff]
    %v120 = vld [vmem:[#allocation5 + $0x20] sm:$0xff]
    %v121 = vld [vmem:[#allocation5 + $0x28] sm:$0xff]
    %v122 = vld [vmem:[#allocation5 + $0x30] sm:$0xff]
    %v123 = vld [vmem:[#allocation5 + $0x38] sm:$0xff]
    %v124 = vld [vmem:[#allocation5 + $0x40] sm:$0xff]
    %v125 = vld [vmem:[#allocation5 + $0x48] sm:$0xff]
    %v126 = vld [vmem:[#allocation5 + $0x50] sm:$0xff]
    %v127 = vld [vmem:[#allocation5 + $0x58] sm:$0xff]
    %v128 = vld [vmem:[#allocation5 + $0x60] sm:$0xff]
    %v129 = vld [vmem:[#allocation5 + $0x68] sm:$0xff]
    %v130 = vld [vmem:[#allocation5 + $0x70] sm:$0xff]
    %v131 = vld [vmem:[#allocation5 + $0x78] sm:$0xff]
    %v132 = vld [vmem:[#allocation5 + $0x80] sm:$0xff]
    %v133 = vld [vmem:[#allocation5 + $0x88] sm:$0xff]
    %v134 = vld [vmem:[#allocation5 + $0x90] sm:$0xff]
    %v135 = vld [vmem:[#allocation5 + $0x98] sm:$0xff]
    %v136 = vld [vmem:[#allocation5 + $0xa0] sm:$0xff]
    %v137 = vld [vmem:[#allocation5 + $0xa8] sm:$0xff]
    %v138 = vld [vmem:[#allocation5 + $0xb0] sm:$0xff]
    %v139 = vld [vmem:[#allocation5 + $0xb8] sm:$0xff]
    %v140 = vld [vmem:[#allocation5 + $0xc0] sm:$0xff]
    %v141 = vld [vmem:[#allocation5 + $0xc8] sm:$0xff]
    %v142 = vld [vmem:[#allocation5 + $0xd0] sm:$0xff]
    %v143 = vld [vmem:[#allocation5 + $0xd8] sm:$0xff]
    %v144 = vld [vmem:[#allocation5 + $0xe0] sm:$0xff]
    %v145 = vld [vmem:[#allocation5 + $0xe8] sm:$0xff]
    %v146 = vld [vmem:[#allocation5 + $0xf0] sm:$0xff]
    %v147 = vld [vmem:[#allocation5 + $0xf8] sm:$0xff]
    %v148 = vld [vmem:[#allocation5 + $0x100] sm:$0xff]
    %v149 = vld [vmem:[#allocation5 + $0x108] sm:$0xff]
    %v150 = vld [vmem:[#allocation5 + $0x110] sm:$0xff]
    %v151 = vld [vmem:[#allocation5 + $0x118] sm:$0xff]
    %v152 = vld [vmem:[#allocation5 + $0x120] sm:$0xff]
    %v153 = vld [vmem:[#allocation5 + $0x128] sm:$0xff]
    %v154 = vld [vmem:[#allocation5 + $0x130] sm:$0xff]
    %v155 = vld [vmem:[#allocation5 + $0x138] sm:$0xff]
    %v156 = vld [vmem:[#allocation5 + $0x140] sm:$0xff]
    %v157 = vld [vmem:[#allocation5 + $0x148] sm:$0xff]
    %v158 = vld [vmem:[#allocation5 + $0x150] sm:$0xff]
    %v159 = vld [vmem:[#allocation5 + $0x158] sm:$0xff]
    %v160 = vld [vmem:[#allocation5 + $0x160] sm:$0xff]
    %v161 = vld [vmem:[#allocation5 + $0x168] sm:$0xff]
    %v162 = vld [vmem:[#allocation5 + $0x170] sm:$0xff]
    %v163 = vld [vmem:[#allocation5 + $0x178] sm:$0xff]
    %v164 = vld [vmem:[#allocation5 + $0x180] sm:$0xff]
    %v165 = vld [vmem:[#allocation5 + $0x188] sm:$0xff]
    %v166 = vld [vmem:[#allocation5 + $0x190] sm:$0xff]
    %v167 = vld [vmem:[#allocation5 + $0x198] sm:$0xff]
    %v168 = vld [vmem:[#allocation5 + $0x1a0] sm:$0xff]
    %v169 = vld [vmem:[#allocation5 + $0x1a8] sm:$0xff]
    %v170 = vld [vmem:[#allocation5 + $0x1b0] sm:$0xff]
    %v171 = vld [vmem:[#allocation5 + $0x1b8] sm:$0xff]
    %v172 = vld [vmem:[#allocation5 + $0x1c0] sm:$0xff]
    %v173 = vld [vmem:[#allocation5 + $0x1c8] sm:$0xff]
    %v174 = vld [vmem:[#allocation5 + $0x1d0] sm:$0xff]
    %v175 = vld [vmem:[#allocation5 + $0x1d8] sm:$0xff]
    %v176 = vld [vmem:[#allocation5 + $0x1e0] sm:$0xff]
    %v177 = vld [vmem:[#allocation5 + $0x1e8] sm:$0xff]
    %v178 = vld [vmem:[#allocation5 + $0x1f0] sm:$0xff]
    %v179 = vld [vmem:[#allocation5 + $0x1f8] sm:$0xff]
    %v180 = vld [vmem:[#allocation5 + $0x200] sm:$0xff]
    %v181 = vld [vmem:[#allocation5 + $0x208] sm:$0xff]
    %v182 = vld [vmem:[#allocation5 + $0x210] sm:$0xff]
    %v183 = vld [vmem:[#allocation5 + $0x218] sm:$0xff]
    %v184 = vld [vmem:[#allocation5 + $0x220] sm:$0xff]
    %v185 = vld [vmem:[#allocation5 + $0x228] sm:$0xff]
    %v186 = vld [vmem:[#allocation5 + $0x230] sm:$0xff]
    %v187 = vld [vmem:[#allocation5 + $0x238] sm:$0xff]
    %v188 = vld [vmem:[#allocation5 + $0x240] sm:$0xff]
    %v189 = vld [vmem:[#allocation5 + $0x248] sm:$0xff]
    %v190 = vld [vmem:[#allocation5 + $0x250] sm:$0xff]
    %v191 = vld [vmem:[#allocation5 + $0x258] sm:$0xff]
    %v192 = vld [vmem:[#allocation5 + $0x260] sm:$0xff]
    %v193 = vld [vmem:[#allocation5 + $0x268] sm:$0xff]
    %v194 = vld [vmem:[#allocation5 + $0x270] sm:$0xff]
    %v195 = vld [vmem:[#allocation5 + $0x278] sm:$0xff]
    %v196 = vld [vmem:[#allocation5 + $0x280] sm:$0xff]
    %v197 = vld [vmem:[#allocation5 + $0x288] sm:$0xff]
    %v198 = vld [vmem:[#allocation5 + $0x290] sm:$0xff]
    %v199 = vld [vmem:[#allocation5 + $0x298] sm:$0xff]
    %v200 = vld [vmem:[#allocation5 + $0x2a0] sm:$0xff]
    %v201 = vld [vmem:[#allocation5 + $0x2a8] sm:$0xff]
    %v202 = vld [vmem:[#allocation5 + $0x2b0] sm:$0xff]
    %v203 = vld [vmem:[#allocation5 + $0x2b8] sm:$0xff]
    %v204 = vld [vmem:[#allocation5 + $0x2c0] sm:$0xff]
    %v205 = vld [vmem:[#allocation5 + $0x2c8] sm:$0xff]
    %v206 = vld [vmem:[#allocation5 + $0x2d0] sm:$0xff]
    %v207 = vld [vmem:[#allocation5 + $0x2d8] sm:$0xff]
    %v208 = vld [vmem:[#allocation5 + $0x2e0] sm:$0xff]
    %v209 = vld [vmem:[#allocation5 + $0x2e8] sm:$0xff]
    %v210 = vld [vmem:[#allocation5 + $0x2f0] sm:$0xff]
    %v211 = vld [vmem:[#allocation5 + $0x2f8] sm:$0xff]
    %v212 = vld [vmem:[#allocation5 + $0x300] sm:$0xff]
    %v213 = vld [vmem:[#allocation5 + $0x308] sm:$0xff]
    %v214 = vld [vmem:[#allocation5 + $0x310] sm:$0xff]
    %v215 = vld [vmem:[#allocation5 + $0x318] sm:$0xff]
    %v216 = vld [vmem:[#allocation5 + $0x320] sm:$0xff]
    %v217 = vld [vmem:[#allocation5 + $0x328] sm:$0xff]
    %v218 = vld [vmem:[#allocation5 + $0x330] sm:$0xff]
    %v219 = vld [vmem:[#allocation5 + $0x338] sm:$0xff]
    %v220 = vld [vmem:[#allocation5 + $0x340] sm:$0xff]
    %v221 = vld [vmem:[#allocation5 + $0x348] sm:$0xff]
    %v222 = vld [vmem:[#allocation5 + $0x350] sm:$0xff]
    %v223 = vld [vmem:[#allocation5 + $0x358] sm:$0xff]
    %v224 = vld [vmem:[#allocation5 + $0x360] sm:$0xff]
    %v225 = vld [vmem:[#allocation5 + $0x368] sm:$0xff]
    %v226 = vld [vmem:[#allocation5 + $0x370] sm:$0xff]
    %v227 = vld [vmem:[#allocation5 + $0x378] sm:$0xff]
    %v228 = vld [vmem:[#allocation5 + $0x380] sm:$0xff]
    %v229 = vld [vmem:[#allocation5 + $0x388] sm:$0xff]
    %v230 = vld [vmem:[#allocation5 + $0x390] sm:$0xff]
    %v231 = vld [vmem:[#allocation5 + $0x398] sm:$0xff]
    %v232 = vld [vmem:[#allocation5 + $0x3a0] sm:$0xff]
    %v233 = vld [vmem:[#allocation5 + $0x3a8] sm:$0xff]
    %v234 = vld [vmem:[#allocation5 + $0x3b0] sm:$0xff]
    %v235 = vld [vmem:[#allocation5 + $0x3b8] sm:$0xff]
    %v236 = vld [vmem:[#allocation5 + $0x3c0] sm:$0xff]
    %v237 = vld [vmem:[#allocation5 + $0x3c8] sm:$0xff]
    %v238 = vld [vmem:[#allocation5 + $0x3d0] sm:$0xff]
    %v239 = vld [vmem:[#allocation5 + $0x3d8] sm:$0xff]
    %v240 = vld [vmem:[#allocation5 + $0x3e0] sm:$0xff]
    %v241 = vld [vmem:[#allocation5 + $0x3e8] sm:$0xff]
    %v242 = vld [vmem:[#allocation5 + $0x3f0] sm:$0xff]
    %v243 = vld [vmem:[#allocation5 + $0x3f8] sm:$0xff]
    %v244 = vld [vmem:[#allocation7] sm:$0xff]
    %v246 = vperm.slane %v244, 0
    %v247 = vperm.slane %v244, 1
    %v248 = vperm.slane %v244, 2
    %v249 = vperm.slane %v244, 3
    %v250 = vperm.slane %v244, 4
    %v251 = vperm.slane %v244, 5
    %v252 = vperm.slane %v244, 6
    %v253 = vperm.slane %v244, 7
    %v269 = vunpack.c.l.b16 %v109
    %v270 = vunpack.c.h.b16 %v109
    %v271 = vunpack.c.l.b16 %v110
    %v272 = vunpack.c.h.b16 %v110
    %v273 = vunpack.c.l.b16 %v111
    %v274 = vunpack.c.h.b16 %v111
    %v275 = vunpack.c.l.b16 %v112
    %v276 = vunpack.c.h.b16 %v112
    %v277 = vunpack.c.l.b16 %v113
    %v278 = vunpack.c.h.b16 %v113
    %v279 = vunpack.c.l.b16 %v114
    %v280 = vunpack.c.h.b16 %v114
    %v281 = vunpack.c.l.b16 %v115
    %v282 = vunpack.c.h.b16 %v115
    %v283 = vpack.c.b16 %v271, %v269
    %v284 = vpack.c.b16 %v272, %v270
    %v285 = vpack.c.b16 %v275, %v273
    %v286 = vpack.c.b16 %v276, %v274
    %v287 = vpack.c.b16 %v279, %v277
    %v288 = vpack.c.b16 %v280, %v278
    %v289 = vpack.c.b16 %v281, %v281
    %v290 = vpack.c.b16 %v282, %v282
    %v427 = vunpack.c.l.b16 %v116
    %v428 = vunpack.c.h.b16 %v116
    %v429 = vunpack.c.l.b16 %v117
    %v430 = vunpack.c.h.b16 %v117
    %v431 = vunpack.c.l.b16 %v118
    %v432 = vunpack.c.h.b16 %v118
    %v433 = vunpack.c.l.b16 %v119
    %v434 = vunpack.c.h.b16 %v119
    %v435 = vunpack.c.l.b16 %v120
    %v436 = vunpack.c.h.b16 %v120
    %v437 = vunpack.c.l.b16 %v121
    %v438 = vunpack.c.h.b16 %v121
    %v439 = vunpack.c.l.b16 %v122
    %v440 = vunpack.c.h.b16 %v122
    %v441 = vunpack.c.l.b16 %v123
    %v442 = vunpack.c.h.b16 %v123
    %v443 = vunpack.c.l.b16 %v124
    %v444 = vunpack.c.h.b16 %v124
    %v445 = vunpack.c.l.b16 %v125
    %v446 = vunpack.c.h.b16 %v125
    %v447 = vunpack.c.l.b16 %v126
    %v448 = vunpack.c.h.b16 %v126
    %v449 = vunpack.c.l.b16 %v127
    %v450 = vunpack.c.h.b16 %v127
    %v451 = vunpack.c.l.b16 %v128
    %v452 = vunpack.c.h.b16 %v128
    %v453 = vunpack.c.l.b16 %v129
    %v454 = vunpack.c.h.b16 %v129
    %v455 = vunpack.c.l.b16 %v130
    %v456 = vunpack.c.h.b16 %v130
    %v457 = vunpack.c.l.b16 %v131
    %v458 = vunpack.c.h.b16 %v131
    %v459 = vunpack.c.l.b16 %v132
    %v460 = vunpack.c.h.b16 %v132
    %v461 = vunpack.c.l.b16 %v133
    %v462 = vunpack.c.h.b16 %v133
    %v463 = vunpack.c.l.b16 %v134
    %v464 = vunpack.c.h.b16 %v134
    %v465 = vunpack.c.l.b16 %v135
    %v466 = vunpack.c.h.b16 %v135
    %v467 = vunpack.c.l.b16 %v136
    %v468 = vunpack.c.h.b16 %v136
    %v469 = vunpack.c.l.b16 %v137
    %v470 = vunpack.c.h.b16 %v137
    %v471 = vunpack.c.l.b16 %v138
    %v472 = vunpack.c.h.b16 %v138
    %v473 = vunpack.c.l.b16 %v139
    %v474 = vunpack.c.h.b16 %v139
    %v475 = vunpack.c.l.b16 %v140
    %v476 = vunpack.c.h.b16 %v140
    %v477 = vunpack.c.l.b16 %v141
    %v478 = vunpack.c.h.b16 %v141
    %v479 = vunpack.c.l.b16 %v142
    %v480 = vunpack.c.h.b16 %v142
    %v481 = vunpack.c.l.b16 %v143
    %v482 = vunpack.c.h.b16 %v143
    %v483 = vunpack.c.l.b16 %v144
    %v484 = vunpack.c.h.b16 %v144
    %v485 = vunpack.c.l.b16 %v145
    %v486 = vunpack.c.h.b16 %v145
    %v487 = vunpack.c.l.b16 %v146
    %v488 = vunpack.c.h.b16 %v146
    %v489 = vunpack.c.l.b16 %v147
    %v490 = vunpack.c.h.b16 %v147
    %v491 = vunpack.c.l.b16 %v148
    %v492 = vunpack.c.h.b16 %v148
    %v493 = vunpack.c.l.b16 %v149
    %v494 = vunpack.c.h.b16 %v149
    %v495 = vunpack.c.l.b16 %v150
    %v496 = vunpack.c.h.b16 %v150
    %v497 = vunpack.c.l.b16 %v151
    %v498 = vunpack.c.h.b16 %v151
    %v499 = vunpack.c.l.b16 %v152
    %v500 = vunpack.c.h.b16 %v152
    %v501 = vunpack.c.l.b16 %v153
    %v502 = vunpack.c.h.b16 %v153
    %v503 = vunpack.c.l.b16 %v154
    %v504 = vunpack.c.h.b16 %v154
    %v505 = vunpack.c.l.b16 %v155
    %v506 = vunpack.c.h.b16 %v155
    %v507 = vunpack.c.l.b16 %v156
    %v508 = vunpack.c.h.b16 %v156
    %v509 = vunpack.c.l.b16 %v157
    %v510 = vunpack.c.h.b16 %v157
    %v511 = vunpack.c.l.b16 %v158
    %v512 = vunpack.c.h.b16 %v158
    %v513 = vunpack.c.l.b16 %v159
    %v514 = vunpack.c.h.b16 %v159
    %v515 = vunpack.c.l.b16 %v160
    %v516 = vunpack.c.h.b16 %v160
    %v517 = vunpack.c.l.b16 %v161
    %v518 = vunpack.c.h.b16 %v161
    %v519 = vunpack.c.l.b16 %v162
    %v520 = vunpack.c.h.b16 %v162
    %v521 = vunpack.c.l.b16 %v163
    %v522 = vunpack.c.h.b16 %v163
    %v523 = vunpack.c.l.b16 %v164
    %v524 = vunpack.c.h.b16 %v164
    %v525 = vunpack.c.l.b16 %v165
    %v526 = vunpack.c.h.b16 %v165
    %v527 = vunpack.c.l.b16 %v166
    %v528 = vunpack.c.h.b16 %v166
    %v529 = vunpack.c.l.b16 %v167
    %v530 = vunpack.c.h.b16 %v167
    %v531 = vunpack.c.l.b16 %v168
    %v532 = vunpack.c.h.b16 %v168
    %v533 = vunpack.c.l.b16 %v169
    %v534 = vunpack.c.h.b16 %v169
    %v535 = vunpack.c.l.b16 %v170
    %v536 = vunpack.c.h.b16 %v170
    %v537 = vunpack.c.l.b16 %v171
    %v538 = vunpack.c.h.b16 %v171
    %v539 = vunpack.c.l.b16 %v172
    %v540 = vunpack.c.h.b16 %v172
    %v541 = vunpack.c.l.b16 %v173
    %v542 = vunpack.c.h.b16 %v173
    %v543 = vunpack.c.l.b16 %v174
    %v544 = vunpack.c.h.b16 %v174
    %v545 = vunpack.c.l.b16 %v175
    %v546 = vunpack.c.h.b16 %v175
    %v547 = vunpack.c.l.b16 %v176
    %v548 = vunpack.c.h.b16 %v176
    %v549 = vunpack.c.l.b16 %v177
    %v550 = vunpack.c.h.b16 %v177
    %v551 = vunpack.c.l.b16 %v178
    %v552 = vunpack.c.h.b16 %v178
    %v553 = vunpack.c.l.b16 %v179
    %v554 = vunpack.c.h.b16 %v179
    %v555 = vunpack.c.l.b16 %v180
    %v556 = vunpack.c.h.b16 %v180
    %v557 = vunpack.c.l.b16 %v181
    %v558 = vunpack.c.h.b16 %v181
    %v559 = vunpack.c.l.b16 %v182
    %v560 = vunpack.c.h.b16 %v182
    %v561 = vunpack.c.l.b16 %v183
    %v562 = vunpack.c.h.b16 %v183
    %v563 = vunpack.c.l.b16 %v184
    %v564 = vunpack.c.h.b16 %v184
    %v565 = vunpack.c.l.b16 %v185
    %v566 = vunpack.c.h.b16 %v185
    %v567 = vunpack.c.l.b16 %v186
    %v568 = vunpack.c.h.b16 %v186
    %v569 = vunpack.c.l.b16 %v187
    %v570 = vunpack.c.h.b16 %v187
    %v571 = vunpack.c.l.b16 %v188
    %v572 = vunpack.c.h.b16 %v188
    %v573 = vunpack.c.l.b16 %v189
    %v574 = vunpack.c.h.b16 %v189
    %v575 = vunpack.c.l.b16 %v190
    %v576 = vunpack.c.h.b16 %v190
    %v577 = vunpack.c.l.b16 %v191
    %v578 = vunpack.c.h.b16 %v191
    %v579 = vunpack.c.l.b16 %v192
    %v580 = vunpack.c.h.b16 %v192
    %v581 = vunpack.c.l.b16 %v193
    %v582 = vunpack.c.h.b16 %v193
    %v583 = vunpack.c.l.b16 %v194
    %v584 = vunpack.c.h.b16 %v194
    %v585 = vunpack.c.l.b16 %v195
    %v586 = vunpack.c.h.b16 %v195
    %v587 = vunpack.c.l.b16 %v196
    %v588 = vunpack.c.h.b16 %v196
    %v589 = vunpack.c.l.b16 %v197
    %v590 = vunpack.c.h.b16 %v197
    %v591 = vunpack.c.l.b16 %v198
    %v592 = vunpack.c.h.b16 %v198
    %v593 = vunpack.c.l.b16 %v199
    %v594 = vunpack.c.h.b16 %v199
    %v595 = vunpack.c.l.b16 %v200
    %v596 = vunpack.c.h.b16 %v200
    %v597 = vunpack.c.l.b16 %v201
    %v598 = vunpack.c.h.b16 %v201
    %v599 = vunpack.c.l.b16 %v202
    %v600 = vunpack.c.h.b16 %v202
    %v601 = vunpack.c.l.b16 %v203
    %v602 = vunpack.c.h.b16 %v203
    %v603 = vunpack.c.l.b16 %v204
    %v604 = vunpack.c.h.b16 %v204
    %v605 = vunpack.c.l.b16 %v205
    %v606 = vunpack.c.h.b16 %v205
    %v607 = vunpack.c.l.b16 %v206
    %v608 = vunpack.c.h.b16 %v206
    %v609 = vunpack.c.l.b16 %v207
    %v610 = vunpack.c.h.b16 %v207
    %v611 = vunpack.c.l.b16 %v208
    %v612 = vunpack.c.h.b16 %v208
    %v613 = vunpack.c.l.b16 %v209
    %v614 = vunpack.c.h.b16 %v209
    %v615 = vunpack.c.l.b16 %v210
    %v616 = vunpack.c.h.b16 %v210
    %v617 = vunpack.c.l.b16 %v211
    %v618 = vunpack.c.h.b16 %v211
    %v619 = vunpack.c.l.b16 %v212
    %v620 = vunpack.c.h.b16 %v212
    %v621 = vunpack.c.l.b16 %v213
    %v622 = vunpack.c.h.b16 %v213
    %v623 = vunpack.c.l.b16 %v214
    %v624 = vunpack.c.h.b16 %v214
    %v625 = vunpack.c.l.b16 %v215
    %v626 = vunpack.c.h.b16 %v215
    %v627 = vunpack.c.l.b16 %v216
    %v628 = vunpack.c.h.b16 %v216
    %v629 = vunpack.c.l.b16 %v217
    %v630 = vunpack.c.h.b16 %v217
    %v631 = vunpack.c.l.b16 %v218
    %v632 = vunpack.c.h.b16 %v218
    %v633 = vunpack.c.l.b16 %v219
    %v634 = vunpack.c.h.b16 %v219
    %v635 = vunpack.c.l.b16 %v220
    %v636 = vunpack.c.h.b16 %v220
    %v637 = vunpack.c.l.b16 %v221
    %v638 = vunpack.c.h.b16 %v221
    %v639 = vunpack.c.l.b16 %v222
    %v640 = vunpack.c.h.b16 %v222
    %v641 = vunpack.c.l.b16 %v223
    %v642 = vunpack.c.h.b16 %v223
    %v643 = vunpack.c.l.b16 %v224
    %v644 = vunpack.c.h.b16 %v224
    %v645 = vunpack.c.l.b16 %v225
    %v646 = vunpack.c.h.b16 %v225
    %v647 = vunpack.c.l.b16 %v226
    %v648 = vunpack.c.h.b16 %v226
    %v649 = vunpack.c.l.b16 %v227
    %v650 = vunpack.c.h.b16 %v227
    %v651 = vunpack.c.l.b16 %v228
    %v652 = vunpack.c.h.b16 %v228
    %v653 = vunpack.c.l.b16 %v229
    %v654 = vunpack.c.h.b16 %v229
    %v655 = vunpack.c.l.b16 %v230
    %v656 = vunpack.c.h.b16 %v230
    %v657 = vunpack.c.l.b16 %v231
    %v658 = vunpack.c.h.b16 %v231
    %v659 = vunpack.c.l.b16 %v232
    %v660 = vunpack.c.h.b16 %v232
    %v661 = vunpack.c.l.b16 %v233
    %v662 = vunpack.c.h.b16 %v233
    %v663 = vunpack.c.l.b16 %v234
    %v664 = vunpack.c.h.b16 %v234
    %v665 = vunpack.c.l.b16 %v235
    %v666 = vunpack.c.h.b16 %v235
    %v667 = vunpack.c.l.b16 %v236
    %v668 = vunpack.c.h.b16 %v236
    %v669 = vunpack.c.l.b16 %v237
    %v670 = vunpack.c.h.b16 %v237
    %v671 = vunpack.c.l.b16 %v238
    %v672 = vunpack.c.h.b16 %v238
    %v673 = vunpack.c.l.b16 %v239
    %v674 = vunpack.c.h.b16 %v239
    %v675 = vunpack.c.l.b16 %v240
    %v676 = vunpack.c.h.b16 %v240
    %v677 = vunpack.c.l.b16 %v241
    %v678 = vunpack.c.h.b16 %v241
    %v679 = vunpack.c.l.b16 %v242
    %v680 = vunpack.c.h.b16 %v242
    %v681 = vunpack.c.l.b16 %v243
    %v682 = vunpack.c.h.b16 %v243
    %v683 = vpack.c.b16 %v435, %v427
    %v684 = vpack.c.b16 %v436, %v428
    %v685 = vpack.c.b16 %v437, %v429
    %v686 = vpack.c.b16 %v438, %v430
    %v687 = vpack.c.b16 %v439, %v431
    %v688 = vpack.c.b16 %v440, %v432
    %v689 = vpack.c.b16 %v441, %v433
    %v690 = vpack.c.b16 %v442, %v434
    %v691 = vpack.c.b16 %v451, %v443
    %v692 = vpack.c.b16 %v452, %v444
    %v693 = vpack.c.b16 %v453, %v445
    %v694 = vpack.c.b16 %v454, %v446
    %v695 = vpack.c.b16 %v455, %v447
    %v696 = vpack.c.b16 %v456, %v448
    %v697 = vpack.c.b16 %v457, %v449
    %v698 = vpack.c.b16 %v458, %v450
    %v699 = vpack.c.b16 %v467, %v459
    %v700 = vpack.c.b16 %v468, %v460
    %v701 = vpack.c.b16 %v469, %v461
    %v702 = vpack.c.b16 %v470, %v462
    %v703 = vpack.c.b16 %v471, %v463
    %v704 = vpack.c.b16 %v472, %v464
    %v705 = vpack.c.b16 %v473, %v465
    %v706 = vpack.c.b16 %v474, %v466
    %v707 = vpack.c.b16 %v483, %v475
    %v708 = vpack.c.b16 %v484, %v476
    %v709 = vpack.c.b16 %v485, %v477
    %v710 = vpack.c.b16 %v486, %v478
    %v711 = vpack.c.b16 %v487, %v479
    %v712 = vpack.c.b16 %v488, %v480
    %v713 = vpack.c.b16 %v489, %v481
    %v714 = vpack.c.b16 %v490, %v482
    %v715 = vpack.c.b16 %v499, %v491
    %v716 = vpack.c.b16 %v500, %v492
    %v717 = vpack.c.b16 %v501, %v493
    %v718 = vpack.c.b16 %v502, %v494
    %v719 = vpack.c.b16 %v503, %v495
    %v720 = vpack.c.b16 %v504, %v496
    %v721 = vpack.c.b16 %v505, %v497
    %v722 = vpack.c.b16 %v506, %v498
    %v723 = vpack.c.b16 %v515, %v507
    %v724 = vpack.c.b16 %v516, %v508
    %v725 = vpack.c.b16 %v517, %v509
    %v726 = vpack.c.b16 %v518, %v510
    %v727 = vpack.c.b16 %v519, %v511
    %v728 = vpack.c.b16 %v520, %v512
    %v729 = vpack.c.b16 %v521, %v513
    %v730 = vpack.c.b16 %v522, %v514
    %v731 = vpack.c.b16 %v531, %v523
    %v732 = vpack.c.b16 %v532, %v524
    %v733 = vpack.c.b16 %v533, %v525
    %v734 = vpack.c.b16 %v534, %v526
    %v735 = vpack.c.b16 %v535, %v527
    %v736 = vpack.c.b16 %v536, %v528
    %v737 = vpack.c.b16 %v537, %v529
    %v738 = vpack.c.b16 %v538, %v530
    %v739 = vpack.c.b16 %v547, %v539
    %v740 = vpack.c.b16 %v548, %v540
    %v741 = vpack.c.b16 %v549, %v541
    %v742 = vpack.c.b16 %v550, %v542
    %v743 = vpack.c.b16 %v551, %v543
    %v744 = vpack.c.b16 %v552, %v544
    %v745 = vpack.c.b16 %v553, %v545
    %v746 = vpack.c.b16 %v554, %v546
    %v747 = vpack.c.b16 %v563, %v555
    %v748 = vpack.c.b16 %v564, %v556
    %v749 = vpack.c.b16 %v565, %v557
    %v750 = vpack.c.b16 %v566, %v558
    %v751 = vpack.c.b16 %v567, %v559
    %v752 = vpack.c.b16 %v568, %v560
    %v753 = vpack.c.b16 %v569, %v561
    %v754 = vpack.c.b16 %v570, %v562
    %v755 = vpack.c.b16 %v579, %v571
    %v756 = vpack.c.b16 %v580, %v572
    %v757 = vpack.c.b16 %v581, %v573
    %v758 = vpack.c.b16 %v582, %v574
    %v759 = vpack.c.b16 %v583, %v575
    %v760 = vpack.c.b16 %v584, %v576
    %v761 = vpack.c.b16 %v585, %v577
    %v762 = vpack.c.b16 %v586, %v578
    %v763 = vpack.c.b16 %v595, %v587
    %v764 = vpack.c.b16 %v596, %v588
    %v765 = vpack.c.b16 %v597, %v589
    %v766 = vpack.c.b16 %v598, %v590
    %v767 = vpack.c.b16 %v599, %v591
    %v768 = vpack.c.b16 %v600, %v592
    %v769 = vpack.c.b16 %v601, %v593
    %v770 = vpack.c.b16 %v602, %v594
    %v771 = vpack.c.b16 %v611, %v603
    %v772 = vpack.c.b16 %v612, %v604
    %v773 = vpack.c.b16 %v613, %v605
    %v774 = vpack.c.b16 %v614, %v606
    %v775 = vpack.c.b16 %v615, %v607
    %v776 = vpack.c.b16 %v616, %v608
    %v777 = vpack.c.b16 %v617, %v609
    %v778 = vpack.c.b16 %v618, %v610
    %v779 = vpack.c.b16 %v627, %v619
    %v780 = vpack.c.b16 %v628, %v620
    %v781 = vpack.c.b16 %v629, %v621
    %v782 = vpack.c.b16 %v630, %v622
    %v783 = vpack.c.b16 %v631, %v623
    %v784 = vpack.c.b16 %v632, %v624
    %v785 = vpack.c.b16 %v633, %v625
    %v786 = vpack.c.b16 %v634, %v626
    %v787 = vpack.c.b16 %v643, %v635
    %v788 = vpack.c.b16 %v644, %v636
    %v789 = vpack.c.b16 %v645, %v637
    %v790 = vpack.c.b16 %v646, %v638
    %v791 = vpack.c.b16 %v647, %v639
    %v792 = vpack.c.b16 %v648, %v640
    %v793 = vpack.c.b16 %v649, %v641
    %v794 = vpack.c.b16 %v650, %v642
    %v795 = vpack.c.b16 %v659, %v651
    %v796 = vpack.c.b16 %v660, %v652
    %v797 = vpack.c.b16 %v661, %v653
    %v798 = vpack.c.b16 %v662, %v654
    %v799 = vpack.c.b16 %v663, %v655
    %v800 = vpack.c.b16 %v664, %v656
    %v801 = vpack.c.b16 %v665, %v657
    %v802 = vpack.c.b16 %v666, %v658
    %v803 = vpack.c.b16 %v675, %v667
    %v804 = vpack.c.b16 %v676, %v668
    %v805 = vpack.c.b16 %v677, %v669
    %v806 = vpack.c.b16 %v678, %v670
    %v807 = vpack.c.b16 %v679, %v671
    %v808 = vpack.c.b16 %v680, %v672
    %v809 = vpack.c.b16 %v681, %v673
    %v810 = vpack.c.b16 %v682, %v674
    %939 = vmatpush.bf16.msra.mxu0 %v739
    %940 = vmatpush.bf16.msra.mxu0 %v731
    %941 = vmatpush.bf16.msra.mxu0 %v723
    %942 = vmatpush.bf16.msra.mxu0 %v715
    %943 = vmatpush.bf16.msra.mxu0 %v707
    %944 = vmatpush.bf16.msra.mxu0 %v699
    %945 = vmatpush.bf16.msra.mxu0 %v691
    %946 = vmatpush.bf16.msra.mxu0 %v683
    %947 = vmatmul.bf16.gmra.mxu0 %v283
    %v948 = vpop.f32.mrf.mxu0
    %v949 = vadd.f32 %v246, %v948
    %v950 = vpop.f32.mrf.mxu0
    %v951 = vadd.f32 %v246, %v950
    %952 = vmatmul.bf16.gmra.mxu0 %v285
    %v953 = vpop.f32.mrf.mxu0
    %v954 = vadd.f32 %v246, %v953
    %v955 = vpop.f32.mrf.mxu0
    %v956 = vadd.f32 %v246, %v955
    %957 = vmatmul.bf16.gmra.mxu0 %v287
    %v958 = vpop.f32.mrf.mxu0
    %v959 = vadd.f32 %v246, %v958
    %v960 = vpop.f32.mrf.mxu0
    %v961 = vadd.f32 %v246, %v960
    %962 = vmatmul.bf16.gmra.mxu0 %v289
    %v963 = vpop.f32.mrf.mxu0
    %v964 = vadd.f32 %v246, %v963
    %v965 = vpop.f32.mrf.mxu0
    %966 = vdwg.mxu0
    %967 = vmatpush.bf16.msra.mxu0 %v803
    %968 = vmatpush.bf16.msra.mxu0 %v795
    %969 = vmatpush.bf16.msra.mxu0 %v787
    %970 = vmatpush.bf16.msra.mxu0 %v779
    %971 = vmatpush.bf16.msra.mxu0 %v771
    %972 = vmatpush.bf16.msra.mxu0 %v763
    %973 = vmatpush.bf16.msra.mxu0 %v755
    %974 = vmatpush.bf16.msra.mxu0 %v747
    %975 = vmatmul.bf16.gmra.mxu0 %v284
    %v976 = vpop.f32.mrf.mxu0
    %v977 = vadd.f32 %v949, %v976
    %v978 = vpop.f32.mrf.mxu0
    %v979 = vadd.f32 %v951, %v978
    %980 = vmatmul.bf16.gmra.mxu0 %v286
    %v981 = vpop.f32.mrf.mxu0
    %v982 = vadd.f32 %v954, %v981
    %v983 = vpop.f32.mrf.mxu0
    %v984 = vadd.f32 %v956, %v983
    %985 = vmatmul.bf16.gmra.mxu0 %v288
    %v986 = vpop.f32.mrf.mxu0
    %v987 = vadd.f32 %v959, %v986
    %v988 = vpop.f32.mrf.mxu0
    %v989 = vadd.f32 %v961, %v988
    %990 = vmatmul.bf16.gmra.mxu0 %v290
    %v991 = vpop.f32.mrf.mxu0
    %v992 = vadd.f32 %v964, %v991
    %v993 = vpop.f32.mrf.mxu0
    %994 = vdwg.mxu0
    %995 = vmatpush.bf16.msra.mxu0 %v740
    %996 = vmatpush.bf16.msra.mxu0 %v732
    %997 = vmatpush.bf16.msra.mxu0 %v724
    %998 = vmatpush.bf16.msra.mxu0 %v716
    %999 = vmatpush.bf16.msra.mxu0 %v708
    %1000 = vmatpush.bf16.msra.mxu0 %v700
    %1001 = vmatpush.bf16.msra.mxu0 %v692
    %1002 = vmatpush.bf16.msra.mxu0 %v684
    %1003 = vmatmul.bf16.gmra.mxu0 %v283
    %v1004 = vpop.f32.mrf.mxu0
    %v1005 = vadd.f32 %v247, %v1004
    %v1006 = vpop.f32.mrf.mxu0
    %v1007 = vadd.f32 %v247, %v1006
    %1008 = vmatmul.bf16.gmra.mxu0 %v285
    %v1009 = vpop.f32.mrf.mxu0
    %v1010 = vadd.f32 %v247, %v1009
    %v1011 = vpop.f32.mrf.mxu0
    %v1012 = vadd.f32 %v247, %v1011
    %1013 = vmatmul.bf16.gmra.mxu0 %v287
    %v1014 = vpop.f32.mrf.mxu0
    %v1015 = vadd.f32 %v247, %v1014
    %v1016 = vpop.f32.mrf.mxu0
    %v1017 = vadd.f32 %v247, %v1016
    %1018 = vmatmul.bf16.gmra.mxu0 %v289
    %v1019 = vpop.f32.mrf.mxu0
    %v1020 = vadd.f32 %v247, %v1019
    %v1021 = vpop.f32.mrf.mxu0
    %1022 = vdwg.mxu0
    %1023 = vmatpush.bf16.msra.mxu0 %v804
    %1024 = vmatpush.bf16.msra.mxu0 %v796
    %1025 = vmatpush.bf16.msra.mxu0 %v788
    %1026 = vmatpush.bf16.msra.mxu0 %v780
    %1027 = vmatpush.bf16.msra.mxu0 %v772
    %1028 = vmatpush.bf16.msra.mxu0 %v764
    %1029 = vmatpush.bf16.msra.mxu0 %v756
    %1030 = vmatpush.bf16.msra.mxu0 %v748
    %1031 = vmatmul.bf16.gmra.mxu0 %v284
    %v1032 = vpop.f32.mrf.mxu0
    %v1033 = vadd.f32 %v1005, %v1032
    %v1034 = vpop.f32.mrf.mxu0
    %v1035 = vadd.f32 %v1007, %v1034
    %1036 = vmatmul.bf16.gmra.mxu0 %v286
    %v1037 = vpop.f32.mrf.mxu0
    %v1038 = vadd.f32 %v1010, %v1037
    %v1039 = vpop.f32.mrf.mxu0
    %v1040 = vadd.f32 %v1012, %v1039
    %1041 = vmatmul.bf16.gmra.mxu0 %v288
    %v1042 = vpop.f32.mrf.mxu0
    %v1043 = vadd.f32 %v1015, %v1042
    %v1044 = vpop.f32.mrf.mxu0
    %v1045 = vadd.f32 %v1017, %v1044
    %1046 = vmatmul.bf16.gmra.mxu0 %v290
    %v1047 = vpop.f32.mrf.mxu0
    %v1048 = vadd.f32 %v1020, %v1047
    %v1049 = vpop.f32.mrf.mxu0
    %1050 = vdwg.mxu0
    %1051 = vmatpush.bf16.msra.mxu0 %v741
    %1052 = vmatpush.bf16.msra.mxu0 %v733
    %1053 = vmatpush.bf16.msra.mxu0 %v725
    %1054 = vmatpush.bf16.msra.mxu0 %v717
    %1055 = vmatpush.bf16.msra.mxu0 %v709
    %1056 = vmatpush.bf16.msra.mxu0 %v701
    %1057 = vmatpush.bf16.msra.mxu0 %v693
    %1058 = vmatpush.bf16.msra.mxu0 %v685
    %1059 = vmatmul.bf16.gmra.mxu0 %v283
    %v1060 = vpop.f32.mrf.mxu0
    %v1061 = vadd.f32 %v248, %v1060
    %v1062 = vpop.f32.mrf.mxu0
    %v1063 = vadd.f32 %v248, %v1062
    %1064 = vmatmul.bf16.gmra.mxu0 %v285
    %v1065 = vpop.f32.mrf.mxu0
    %v1066 = vadd.f32 %v248, %v1065
    %v1067 = vpop.f32.mrf.mxu0
    %v1068 = vadd.f32 %v248, %v1067
    %1069 = vmatmul.bf16.gmra.mxu0 %v287
    %v1070 = vpop.f32.mrf.mxu0
    %v1071 = vadd.f32 %v248, %v1070
    %v1072 = vpop.f32.mrf.mxu0
    %v1073 = vadd.f32 %v248, %v1072
    %1074 = vmatmul.bf16.gmra.mxu0 %v289
    %v1075 = vpop.f32.mrf.mxu0
    %v1076 = vadd.f32 %v248, %v1075
    %v1077 = vpop.f32.mrf.mxu0
    %1078 = vdwg.mxu0
    %1079 = vmatpush.bf16.msra.mxu0 %v805
    %1080 = vmatpush.bf16.msra.mxu0 %v797
    %1081 = vmatpush.bf16.msra.mxu0 %v789
    %1082 = vmatpush.bf16.msra.mxu0 %v781
    %1083 = vmatpush.bf16.msra.mxu0 %v773
    %1084 = vmatpush.bf16.msra.mxu0 %v765
    %1085 = vmatpush.bf16.msra.mxu0 %v757
    %1086 = vmatpush.bf16.msra.mxu0 %v749
    %1087 = vmatmul.bf16.gmra.mxu0 %v284
    %v1088 = vpop.f32.mrf.mxu0
    %v1089 = vadd.f32 %v1061, %v1088
    %v1090 = vpop.f32.mrf.mxu0
    %v1091 = vadd.f32 %v1063, %v1090
    %1092 = vmatmul.bf16.gmra.mxu0 %v286
    %v1093 = vpop.f32.mrf.mxu0
    %v1094 = vadd.f32 %v1066, %v1093
    %v1095 = vpop.f32.mrf.mxu0
    %v1096 = vadd.f32 %v1068, %v1095
    %1097 = vmatmul.bf16.gmra.mxu0 %v288
    %v1098 = vpop.f32.mrf.mxu0
    %v1099 = vadd.f32 %v1071, %v1098
    %v1100 = vpop.f32.mrf.mxu0
    %v1101 = vadd.f32 %v1073, %v1100
    %1102 = vmatmul.bf16.gmra.mxu0 %v290
    %v1103 = vpop.f32.mrf.mxu0
    %v1104 = vadd.f32 %v1076, %v1103
    %v1105 = vpop.f32.mrf.mxu0
    %1106 = vdwg.mxu0
    %1107 = vmatpush.bf16.msra.mxu0 %v742
    %1108 = vmatpush.bf16.msra.mxu0 %v734
    %1109 = vmatpush.bf16.msra.mxu0 %v726
    %1110 = vmatpush.bf16.msra.mxu0 %v718
    %1111 = vmatpush.bf16.msra.mxu0 %v710
    %1112 = vmatpush.bf16.msra.mxu0 %v702
    %1113 = vmatpush.bf16.msra.mxu0 %v694
    %1114 = vmatpush.bf16.msra.mxu0 %v686
    %1115 = vmatmul.bf16.gmra.mxu0 %v283
    %v1116 = vpop.f32.mrf.mxu0
    %v1117 = vadd.f32 %v249, %v1116
    %v1118 = vpop.f32.mrf.mxu0
    %v1119 = vadd.f32 %v249, %v1118
    %1120 = vmatmul.bf16.gmra.mxu0 %v285
    %v1121 = vpop.f32.mrf.mxu0
    %v1122 = vadd.f32 %v249, %v1121
    %v1123 = vpop.f32.mrf.mxu0
    %v1124 = vadd.f32 %v249, %v1123
    %1125 = vmatmul.bf16.gmra.mxu0 %v287
    %v1126 = vpop.f32.mrf.mxu0
    %v1127 = vadd.f32 %v249, %v1126
    %v1128 = vpop.f32.mrf.mxu0
    %v1129 = vadd.f32 %v249, %v1128
    %1130 = vmatmul.bf16.gmra.mxu0 %v289
    %v1131 = vpop.f32.mrf.mxu0
    %v1132 = vadd.f32 %v249, %v1131
    %v1133 = vpop.f32.mrf.mxu0
    %1134 = vdwg.mxu0
    %1135 = vmatpush.bf16.msra.mxu0 %v806
    %1136 = vmatpush.bf16.msra.mxu0 %v798
    %1137 = vmatpush.bf16.msra.mxu0 %v790
    %1138 = vmatpush.bf16.msra.mxu0 %v782
    %1139 = vmatpush.bf16.msra.mxu0 %v774
    %1140 = vmatpush.bf16.msra.mxu0 %v766
    %1141 = vmatpush.bf16.msra.mxu0 %v758
    %1142 = vmatpush.bf16.msra.mxu0 %v750
    %1143 = vmatmul.bf16.gmra.mxu0 %v284
    %v1144 = vpop.f32.mrf.mxu0
    %v1145 = vadd.f32 %v1117, %v1144
    %v1146 = vpop.f32.mrf.mxu0
    %v1147 = vadd.f32 %v1119, %v1146
    %1148 = vmatmul.bf16.gmra.mxu0 %v286
    %v1149 = vpop.f32.mrf.mxu0
    %v1150 = vadd.f32 %v1122, %v1149
    %v1151 = vpop.f32.mrf.mxu0
    %v1152 = vadd.f32 %v1124, %v1151
    %1153 = vmatmul.bf16.gmra.mxu0 %v288
    %v1154 = vpop.f32.mrf.mxu0
    %v1155 = vadd.f32 %v1127, %v1154
    %v1156 = vpop.f32.mrf.mxu0
    %v1157 = vadd.f32 %v1129, %v1156
    %1158 = vmatmul.bf16.gmra.mxu0 %v290
    %v1159 = vpop.f32.mrf.mxu0
    %v1160 = vadd.f32 %v1132, %v1159
    %v1161 = vpop.f32.mrf.mxu0
    %1162 = vdwg.mxu0
    %1163 = vmatpush.bf16.msra.mxu0 %v743
    %1164 = vmatpush.bf16.msra.mxu0 %v735
    %1165 = vmatpush.bf16.msra.mxu0 %v727
    %1166 = vmatpush.bf16.msra.mxu0 %v719
    %1167 = vmatpush.bf16.msra.mxu0 %v711
    %1168 = vmatpush.bf16.msra.mxu0 %v703
    %1169 = vmatpush.bf16.msra.mxu0 %v695
    %1170 = vmatpush.bf16.msra.mxu0 %v687
    %1171 = vmatmul.bf16.gmra.mxu0 %v283
    %v1172 = vpop.f32.mrf.mxu0
    %v1173 = vadd.f32 %v250, %v1172
    %v1174 = vpop.f32.mrf.mxu0
    %v1175 = vadd.f32 %v250, %v1174
    %1176 = vmatmul.bf16.gmra.mxu0 %v285
    %v1177 = vpop.f32.mrf.mxu0
    %v1178 = vadd.f32 %v250, %v1177
    %v1179 = vpop.f32.mrf.mxu0
    %v1180 = vadd.f32 %v250, %v1179
    %1181 = vmatmul.bf16.gmra.mxu0 %v287
    %v1182 = vpop.f32.mrf.mxu0
    %v1183 = vadd.f32 %v250, %v1182
    %v1184 = vpop.f32.mrf.mxu0
    %v1185 = vadd.f32 %v250, %v1184
    %1186 = vmatmul.bf16.gmra.mxu0 %v289
    %v1187 = vpop.f32.mrf.mxu0
    %v1188 = vadd.f32 %v250, %v1187
    %v1189 = vpop.f32.mrf.mxu0
    %1190 = vdwg.mxu0
    %1191 = vmatpush.bf16.msra.mxu0 %v807
    %1192 = vmatpush.bf16.msra.mxu0 %v799
    %1193 = vmatpush.bf16.msra.mxu0 %v791
    %1194 = vmatpush.bf16.msra.mxu0 %v783
    %1195 = vmatpush.bf16.msra.mxu0 %v775
    %1196 = vmatpush.bf16.msra.mxu0 %v767
    %1197 = vmatpush.bf16.msra.mxu0 %v759
    %1198 = vmatpush.bf16.msra.mxu0 %v751
    %1199 = vmatmul.bf16.gmra.mxu0 %v284
    %v1200 = vpop.f32.mrf.mxu0
    %v1201 = vadd.f32 %v1173, %v1200
    %v1202 = vpop.f32.mrf.mxu0
    %v1203 = vadd.f32 %v1175, %v1202
    %1204 = vmatmul.bf16.gmra.mxu0 %v286
    %v1205 = vpop.f32.mrf.mxu0
    %v1206 = vadd.f32 %v1178, %v1205
    %v1207 = vpop.f32.mrf.mxu0
    %v1208 = vadd.f32 %v1180, %v1207
    %1209 = vmatmul.bf16.gmra.mxu0 %v288
    %v1210 = vpop.f32.mrf.mxu0
    %v1211 = vadd.f32 %v1183, %v1210
    %v1212 = vpop.f32.mrf.mxu0
    %v1213 = vadd.f32 %v1185, %v1212
    %1214 = vmatmul.bf16.gmra.mxu0 %v290
    %v1215 = vpop.f32.mrf.mxu0
    %v1216 = vadd.f32 %v1188, %v1215
    %v1217 = vpop.f32.mrf.mxu0
    %1218 = vdwg.mxu0
    %1219 = vmatpush.bf16.msra.mxu0 %v744
    %1220 = vmatpush.bf16.msra.mxu0 %v736
    %1221 = vmatpush.bf16.msra.mxu0 %v728
    %1222 = vmatpush.bf16.msra.mxu0 %v720
    %1223 = vmatpush.bf16.msra.mxu0 %v712
    %1224 = vmatpush.bf16.msra.mxu0 %v704
    %1225 = vmatpush.bf16.msra.mxu0 %v696
    %1226 = vmatpush.bf16.msra.mxu0 %v688
    %1227 = vmatmul.bf16.gmra.mxu0 %v283
    %v1228 = vpop.f32.mrf.mxu0
    %v1229 = vadd.f32 %v251, %v1228
    %v1230 = vpop.f32.mrf.mxu0
    %v1231 = vadd.f32 %v251, %v1230
    %1232 = vmatmul.bf16.gmra.mxu0 %v285
    %v1233 = vpop.f32.mrf.mxu0
    %v1234 = vadd.f32 %v251, %v1233
    %v1235 = vpop.f32.mrf.mxu0
    %v1236 = vadd.f32 %v251, %v1235
    %1237 = vmatmul.bf16.gmra.mxu0 %v287
    %v1238 = vpop.f32.mrf.mxu0
    %v1239 = vadd.f32 %v251, %v1238
    %v1240 = vpop.f32.mrf.mxu0
    %v1241 = vadd.f32 %v251, %v1240
    %1242 = vmatmul.bf16.gmra.mxu0 %v289
    %v1243 = vpop.f32.mrf.mxu0
    %v1244 = vadd.f32 %v251, %v1243
    %v1245 = vpop.f32.mrf.mxu0
    %1246 = vdwg.mxu0
    %1247 = vmatpush.bf16.msra.mxu0 %v808
    %1248 = vmatpush.bf16.msra.mxu0 %v800
    %1249 = vmatpush.bf16.msra.mxu0 %v792
    %1250 = vmatpush.bf16.msra.mxu0 %v784
    %1251 = vmatpush.bf16.msra.mxu0 %v776
    %1252 = vmatpush.bf16.msra.mxu0 %v768
    %1253 = vmatpush.bf16.msra.mxu0 %v760
    %1254 = vmatpush.bf16.msra.mxu0 %v752
    %1255 = vmatmul.bf16.gmra.mxu0 %v284
    %v1256 = vpop.f32.mrf.mxu0
    %v1257 = vadd.f32 %v1229, %v1256
    %v1258 = vpop.f32.mrf.mxu0
    %v1259 = vadd.f32 %v1231, %v1258
    %1260 = vmatmul.bf16.gmra.mxu0 %v286
    %v1261 = vpop.f32.mrf.mxu0
    %v1262 = vadd.f32 %v1234, %v1261
    %v1263 = vpop.f32.mrf.mxu0
    %v1264 = vadd.f32 %v1236, %v1263
    %1265 = vmatmul.bf16.gmra.mxu0 %v288
    %v1266 = vpop.f32.mrf.mxu0
    %v1267 = vadd.f32 %v1239, %v1266
    %v1268 = vpop.f32.mrf.mxu0
    %v1269 = vadd.f32 %v1241, %v1268
    %1270 = vmatmul.bf16.gmra.mxu0 %v290
    %v1271 = vpop.f32.mrf.mxu0
    %v1272 = vadd.f32 %v1244, %v1271
    %v1273 = vpop.f32.mrf.mxu0
    %1274 = vdwg.mxu0
    %1275 = vmatpush.bf16.msra.mxu0 %v745
    %1276 = vmatpush.bf16.msra.mxu0 %v737
    %1277 = vmatpush.bf16.msra.mxu0 %v729
    %1278 = vmatpush.bf16.msra.mxu0 %v721
    %1279 = vmatpush.bf16.msra.mxu0 %v713
    %1280 = vmatpush.bf16.msra.mxu0 %v705
    %1281 = vmatpush.bf16.msra.mxu0 %v697
    %1282 = vmatpush.bf16.msra.mxu0 %v689
    %1283 = vmatmul.bf16.gmra.mxu0 %v283
    %v1284 = vpop.f32.mrf.mxu0
    %v1285 = vadd.f32 %v252, %v1284
    %v1286 = vpop.f32.mrf.mxu0
    %v1287 = vadd.f32 %v252, %v1286
    %1288 = vmatmul.bf16.gmra.mxu0 %v285
    %v1289 = vpop.f32.mrf.mxu0
    %v1290 = vadd.f32 %v252, %v1289
    %v1291 = vpop.f32.mrf.mxu0
    %v1292 = vadd.f32 %v252, %v1291
    %1293 = vmatmul.bf16.gmra.mxu0 %v287
    %v1294 = vpop.f32.mrf.mxu0
    %v1295 = vadd.f32 %v252, %v1294
    %v1296 = vpop.f32.mrf.mxu0
    %v1297 = vadd.f32 %v252, %v1296
    %1298 = vmatmul.bf16.gmra.mxu0 %v289
    %v1299 = vpop.f32.mrf.mxu0
    %v1300 = vadd.f32 %v252, %v1299
    %v1301 = vpop.f32.mrf.mxu0
    %1302 = vdwg.mxu0
    %1303 = vmatpush.bf16.msra.mxu0 %v809
    %1304 = vmatpush.bf16.msra.mxu0 %v801
    %1305 = vmatpush.bf16.msra.mxu0 %v793
    %1306 = vmatpush.bf16.msra.mxu0 %v785
    %1307 = vmatpush.bf16.msra.mxu0 %v777
    %1308 = vmatpush.bf16.msra.mxu0 %v769
    %1309 = vmatpush.bf16.msra.mxu0 %v761
    %1310 = vmatpush.bf16.msra.mxu0 %v753
    %1311 = vmatmul.bf16.gmra.mxu0 %v284
    %v1312 = vpop.f32.mrf.mxu0
    %v1313 = vadd.f32 %v1285, %v1312
    %v1314 = vpop.f32.mrf.mxu0
    %v1315 = vadd.f32 %v1287, %v1314
    %1316 = vmatmul.bf16.gmra.mxu0 %v286
    %v1317 = vpop.f32.mrf.mxu0
    %v1318 = vadd.f32 %v1290, %v1317
    %v1319 = vpop.f32.mrf.mxu0
    %v1320 = vadd.f32 %v1292, %v1319
    %1321 = vmatmul.bf16.gmra.mxu0 %v288
    %v1322 = vpop.f32.mrf.mxu0
    %v1323 = vadd.f32 %v1295, %v1322
    %v1324 = vpop.f32.mrf.mxu0
    %v1325 = vadd.f32 %v1297, %v1324
    %1326 = vmatmul.bf16.gmra.mxu0 %v290
    %v1327 = vpop.f32.mrf.mxu0
    %v1328 = vadd.f32 %v1300, %v1327
    %v1329 = vpop.f32.mrf.mxu0
    %1330 = vdwg.mxu0
    %1331 = vmatpush.bf16.msra.mxu0 %v746
    %1332 = vmatpush.bf16.msra.mxu0 %v738
    %1333 = vmatpush.bf16.msra.mxu0 %v730
    %1334 = vmatpush.bf16.msra.mxu0 %v722
    %1335 = vmatpush.bf16.msra.mxu0 %v714
    %1336 = vmatpush.bf16.msra.mxu0 %v706
    %1337 = vmatpush.bf16.msra.mxu0 %v698
    %1338 = vmatpush.bf16.msra.mxu0 %v690
    %1339 = vmatmul.bf16.gmra.mxu0 %v283
    %v1340 = vpop.f32.mrf.mxu0
    %v1341 = vadd.f32 %v253, %v1340
    %v1342 = vpop.f32.mrf.mxu0
    %v1343 = vadd.f32 %v253, %v1342
    %1344 = vmatmul.bf16.gmra.mxu0 %v285
    %v1345 = vpop.f32.mrf.mxu0
    %v1346 = vadd.f32 %v253, %v1345
    %v1347 = vpop.f32.mrf.mxu0
    %v1348 = vadd.f32 %v253, %v1347
    %1349 = vmatmul.bf16.gmra.mxu0 %v287
    %v1350 = vpop.f32.mrf.mxu0
    %v1351 = vadd.f32 %v253, %v1350
    %v1352 = vpop.f32.mrf.mxu0
    %v1353 = vadd.f32 %v253, %v1352
    %1354 = vmatmul.bf16.gmra.mxu0 %v289
    %v1355 = vpop.f32.mrf.mxu0
    %v1356 = vadd.f32 %v253, %v1355
    %v1357 = vpop.f32.mrf.mxu0
    %1358 = vdwg.mxu0
    %1359 = vmatpush.bf16.msra.mxu0 %v810
    %1360 = vmatpush.bf16.msra.mxu0 %v802
    %1361 = vmatpush.bf16.msra.mxu0 %v794
    %1362 = vmatpush.bf16.msra.mxu0 %v786
    %1363 = vmatpush.bf16.msra.mxu0 %v778
    %1364 = vmatpush.bf16.msra.mxu0 %v770
    %1365 = vmatpush.bf16.msra.mxu0 %v762
    %1366 = vmatpush.bf16.msra.mxu0 %v754
    %1367 = vmatmul.bf16.gmra.mxu0 %v284
    %v1368 = vpop.f32.mrf.mxu0
    %v1369 = vadd.f32 %v1341, %v1368
    %v1370 = vpop.f32.mrf.mxu0
    %v1371 = vadd.f32 %v1343, %v1370
    %1372 = vmatmul.bf16.gmra.mxu0 %v286
    %v1373 = vpop.f32.mrf.mxu0
    %v1374 = vadd.f32 %v1346, %v1373
    %v1375 = vpop.f32.mrf.mxu0
    %v1376 = vadd.f32 %v1348, %v1375
    %1377 = vmatmul.bf16.gmra.mxu0 %v288
    %v1378 = vpop.f32.mrf.mxu0
    %v1379 = vadd.f32 %v1351, %v1378
    %v1380 = vpop.f32.mrf.mxu0
    %v1381 = vadd.f32 %v1353, %v1380
    %1382 = vmatmul.bf16.gmra.mxu0 %v290
    %v1383 = vpop.f32.mrf.mxu0
    %v1384 = vadd.f32 %v1356, %v1383
    %v1385 = vpop.f32.mrf.mxu0
    %1386 = vdwg.mxu0
    %v1387 = vmax.f32 %v977, 0.0
    %v1388 = vmax.f32 %v1033, 0.0
    %v1389 = vmax.f32 %v1089, 0.0
    %v1390 = vmax.f32 %v1145, 0.0
    %v1391 = vmax.f32 %v1201, 0.0
    %v1392 = vmax.f32 %v1257, 0.0
    %v1393 = vmax.f32 %v1313, 0.0
    %v1394 = vmax.f32 %v1369, 0.0
    %v1395 = vmax.f32 %v979, 0.0
    %v1396 = vmax.f32 %v1035, 0.0
    %v1397 = vmax.f32 %v1091, 0.0
    %v1398 = vmax.f32 %v1147, 0.0
    %v1399 = vmax.f32 %v1203, 0.0
    %v1400 = vmax.f32 %v1259, 0.0
    %v1401 = vmax.f32 %v1315, 0.0
    %v1402 = vmax.f32 %v1371, 0.0
    %v1403 = vmax.f32 %v982, 0.0
    %v1404 = vmax.f32 %v1038, 0.0
    %v1405 = vmax.f32 %v1094, 0.0
    %v1406 = vmax.f32 %v1150, 0.0
    %v1407 = vmax.f32 %v1206, 0.0
    %v1408 = vmax.f32 %v1262, 0.0
    %v1409 = vmax.f32 %v1318, 0.0
    %v1410 = vmax.f32 %v1374, 0.0
    %v1411 = vmax.f32 %v984, 0.0
    %v1412 = vmax.f32 %v1040, 0.0
    %v1413 = vmax.f32 %v1096, 0.0
    %v1414 = vmax.f32 %v1152, 0.0
    %v1415 = vmax.f32 %v1208, 0.0
    %v1416 = vmax.f32 %v1264, 0.0
    %v1417 = vmax.f32 %v1320, 0.0
    %v1418 = vmax.f32 %v1376, 0.0
    %v1419 = vmax.f32 %v987, 0.0
    %v1420 = vmax.f32 %v1043, 0.0
    %v1421 = vmax.f32 %v1099, 0.0
    %v1422 = vmax.f32 %v1155, 0.0
    %v1423 = vmax.f32 %v1211, 0.0
    %v1424 = vmax.f32 %v1267, 0.0
    %v1425 = vmax.f32 %v1323, 0.0
    %v1426 = vmax.f32 %v1379, 0.0
    %v1427 = vmax.f32 %v989, 0.0
    %v1428 = vmax.f32 %v1045, 0.0
    %v1429 = vmax.f32 %v1101, 0.0
    %v1430 = vmax.f32 %v1157, 0.0
    %v1431 = vmax.f32 %v1213, 0.0
    %v1432 = vmax.f32 %v1269, 0.0
    %v1433 = vmax.f32 %v1325, 0.0
    %v1434 = vmax.f32 %v1381, 0.0
    %v1435 = vmax.f32 %v992, 0.0
    %v1436 = vmax.f32 %v1048, 0.0
    %v1437 = vmax.f32 %v1104, 0.0
    %v1438 = vmax.f32 %v1160, 0.0
    %v1439 = vmax.f32 %v1216, 0.0
    %v1440 = vmax.f32 %v1272, 0.0
    %v1441 = vmax.f32 %v1328, 0.0
    %v1442 = vmax.f32 %v1384, 0.0
    %v1443 = vpack.c.bf16 %v1388, %v1387
    %v1444 = vpack.c.bf16 %v1390, %v1389
    %v1445 = vpack.c.bf16 %v1392, %v1391
    %v1446 = vpack.c.bf16 %v1394, %v1393
    %v1447 = vpack.c.bf16 %v1396, %v1395
    %v1448 = vpack.c.bf16 %v1398, %v1397
    %v1449 = vpack.c.bf16 %v1400, %v1399
    %v1450 = vpack.c.bf16 %v1402, %v1401
    %v1451 = vpack.c.bf16 %v1404, %v1403
    %v1452 = vpack.c.bf16 %v1406, %v1405
    %v1453 = vpack.c.bf16 %v1408, %v1407
    %v1454 = vpack.c.bf16 %v1410, %v1409
    %v1455 = vpack.c.bf16 %v1412, %v1411
    %v1456 = vpack.c.bf16 %v1414, %v1413
    %v1457 = vpack.c.bf16 %v1416, %v1415
    %v1458 = vpack.c.bf16 %v1418, %v1417
    %v1459 = vpack.c.bf16 %v1420, %v1419
    %v1460 = vpack.c.bf16 %v1422, %v1421
    %v1461 = vpack.c.bf16 %v1424, %v1423
    %v1462 = vpack.c.bf16 %v1426, %v1425
    %v1463 = vpack.c.bf16 %v1428, %v1427
    %v1464 = vpack.c.bf16 %v1430, %v1429
    %v1465 = vpack.c.bf16 %v1432, %v1431
    %v1466 = vpack.c.bf16 %v1434, %v1433
    %v1467 = vpack.c.bf16 %v1436, %v1435
    %v1468 = vpack.c.bf16 %v1438, %v1437
    %v1469 = vpack.c.bf16 %v1440, %v1439
    %v1470 = vpack.c.bf16 %v1442, %v1441
    %1471 = vst [vmem:[#allocation11] sm:$0xff] %v1443
    %1472 = vst [vmem:[#allocation11 + $0x8] sm:$0xff] %v1444
    %1473 = vst [vmem:[#allocation11 + $0x10] sm:$0xff] %v1445
    %1474 = vst [vmem:[#allocation11 + $0x18] sm:$0xff] %v1446
    %1475 = vst [vmem:[#allocation11 + $0x20] sm:$0xff] %v1447
    %1476 = vst [vmem:[#allocation11 + $0x28] sm:$0xff] %v1448
    %1477 = vst [vmem:[#allocation11 + $0x30] sm:$0xff] %v1449
    %1478 = vst [vmem:[#allocation11 + $0x38] sm:$0xff] %v1450
    %1479 = vst [vmem:[#allocation11 + $0x40] sm:$0xff] %v1451
    %1480 = vst [vmem:[#allocation11 + $0x48] sm:$0xff] %v1452
    %1481 = vst [vmem:[#allocation11 + $0x50] sm:$0xff] %v1453
    %1482 = vst [vmem:[#allocation11 + $0x58] sm:$0xff] %v1454
    %1483 = vst [vmem:[#allocation11 + $0x60] sm:$0xff] %v1455
    %1484 = vst [vmem:[#allocation11 + $0x68] sm:$0xff] %v1456
    %1485 = vst [vmem:[#allocation11 + $0x70] sm:$0xff] %v1457
    %1486 = vst [vmem:[#allocation11 + $0x78] sm:$0xff] %v1458
    %1487 = vst [vmem:[#allocation11 + $0x80] sm:$0xff] %v1459
    %1488 = vst [vmem:[#allocation11 + $0x88] sm:$0xff] %v1460
    %1489 = vst [vmem:[#allocation11 + $0x90] sm:$0xff] %v1461
    %1490 = vst [vmem:[#allocation11 + $0x98] sm:$0xff] %v1462
    %1491 = vst [vmem:[#allocation11 + $0xa0] sm:$0xff] %v1463
    %1492 = vst [vmem:[#allocation11 + $0xa8] sm:$0xff] %v1464
    %1493 = vst [vmem:[#allocation11 + $0xb0] sm:$0xff] %v1465
    %1494 = vst [vmem:[#allocation11 + $0xb8] sm:$0xff] %v1466
    %1495 = vst [vmem:[#allocation11 + $0xc0] sm:$0xff] %v1467
    %1496 = vst [vmem:[#allocation11 + $0xc8] sm:$0xff] %v1468
    %1497 = vst [vmem:[#allocation11 + $0xd0] sm:$0xff] %v1469
    %1498 = vst [vmem:[#allocation11 + $0xd8] sm:$0xff] %v1470
    %v1499 = vld [vmem:[#allocation10] sm:$0xff]
    %v1500 = vld [vmem:[#allocation10 + $0x8] sm:$0xff]
    %v1501 = vld [vmem:[#allocation10 + $0x10] sm:$0xff]
    %v1502 = vld [vmem:[#allocation10 + $0x18] sm:$0xff]
    %v1503 = vld [vmem:[#allocation10 + $0x20] sm:$0xff]
    %v1504 = vld [vmem:[#allocation10 + $0x28] sm:$0xff]
    %v1505 = vld [vmem:[#allocation10 + $0x30] sm:$0xff]
    %v1506 = vld [vmem:[#allocation10 + $0x38] sm:$0xff]
    %v1507 = vld [vmem:[#allocation10 + $0x40] sm:$0xff]
    %v1508 = vld [vmem:[#allocation10 + $0x48] sm:$0xff]
    %v1509 = vld [vmem:[#allocation10 + $0x50] sm:$0xff]
    %v1510 = vld [vmem:[#allocation10 + $0x58] sm:$0xff]
    %v1511 = vld [vmem:[#allocation10 + $0x60] sm:$0xff]
    %v1512 = vld [vmem:[#allocation10 + $0x68] sm:$0xff]
    %v1513 = vld [vmem:[#allocation8] sm:$0xff]
    %v1514 = vld [vmem:[#allocation8 + $0x8] sm:$0xff]
    %v1515 = vld [vmem:[#allocation8 + $0x10] sm:$0xff]
    %v1516 = vld [vmem:[#allocation8 + $0x18] sm:$0xff]
    %v1517 = vld [vmem:[#allocation8 + $0x20] sm:$0xff]
    %v1518 = vld [vmem:[#allocation8 + $0x28] sm:$0xff]
    %v1519 = vld [vmem:[#allocation8 + $0x30] sm:$0xff]
    %v1520 = vld [vmem:[#allocation8 + $0x38] sm:$0xff]
    %v1521 = vld [vmem:[#allocation8 + $0x40] sm:$0xff]
    %v1522 = vld [vmem:[#allocation8 + $0x48] sm:$0xff]
    %v1523 = vld [vmem:[#allocation8 + $0x50] sm:$0xff]
    %v1524 = vld [vmem:[#allocation8 + $0x58] sm:$0xff]
    %v1525 = vld [vmem:[#allocation8 + $0x60] sm:$0xff]
    %v1526 = vld [vmem:[#allocation8 + $0x68] sm:$0xff]
    %v1527 = vld [vmem:[#allocation8 + $0x70] sm:$0xff]
    %v1528 = vld [vmem:[#allocation8 + $0x78] sm:$0xff]
    %v1529 = vld [vmem:[#allocation8 + $0x80] sm:$0xff]
    %v1530 = vld [vmem:[#allocation8 + $0x88] sm:$0xff]
    %v1531 = vld [vmem:[#allocation8 + $0x90] sm:$0xff]
    %v1532 = vld [vmem:[#allocation8 + $0x98] sm:$0xff]
    %v1533 = vld [vmem:[#allocation8 + $0xa0] sm:$0xff]
    %v1534 = vld [vmem:[#allocation8 + $0xa8] sm:$0xff]
    %v1535 = vld [vmem:[#allocation8 + $0xb0] sm:$0xff]
    %v1536 = vld [vmem:[#allocation8 + $0xb8] sm:$0xff]
    %v1537 = vld [vmem:[#allocation8 + $0xc0] sm:$0xff]
    %v1538 = vld [vmem:[#allocation8 + $0xc8] sm:$0xff]
    %v1539 = vld [vmem:[#allocation8 + $0xd0] sm:$0xff]
    %v1540 = vld [vmem:[#allocation8 + $0xd8] sm:$0xff]
    %v1541 = vld [vmem:[#allocation8 + $0xe0] sm:$0xff]
    %v1542 = vld [vmem:[#allocation8 + $0xe8] sm:$0xff]
    %v1543 = vld [vmem:[#allocation8 + $0xf0] sm:$0xff]
    %v1544 = vld [vmem:[#allocation8 + $0xf8] sm:$0xff]
    %v1545 = vld [vmem:[#allocation8 + $0x100] sm:$0xff]
    %v1546 = vld [vmem:[#allocation8 + $0x108] sm:$0xff]
    %v1547 = vld [vmem:[#allocation8 + $0x110] sm:$0xff]
    %v1548 = vld [vmem:[#allocation8 + $0x118] sm:$0xff]
    %v1549 = vld [vmem:[#allocation8 + $0x120] sm:$0xff]
    %v1550 = vld [vmem:[#allocation8 + $0x128] sm:$0xff]
    %v1551 = vld [vmem:[#allocation8 + $0x130] sm:$0xff]
    %v1552 = vld [vmem:[#allocation8 + $0x138] sm:$0xff]
    %v1553 = vld [vmem:[#allocation8 + $0x140] sm:$0xff]
    %v1554 = vld [vmem:[#allocation8 + $0x148] sm:$0xff]
    %v1555 = vld [vmem:[#allocation8 + $0x150] sm:$0xff]
    %v1556 = vld [vmem:[#allocation8 + $0x158] sm:$0xff]
    %v1557 = vld [vmem:[#allocation8 + $0x160] sm:$0xff]
    %v1558 = vld [vmem:[#allocation8 + $0x168] sm:$0xff]
    %v1559 = vld [vmem:[#allocation8 + $0x170] sm:$0xff]
    %v1560 = vld [vmem:[#allocation8 + $0x178] sm:$0xff]
    %v1561 = vld [vmem:[#allocation8 + $0x180] sm:$0xff]
    %v1562 = vld [vmem:[#allocation8 + $0x188] sm:$0xff]
    %v1563 = vld [vmem:[#allocation8 + $0x190] sm:$0xff]
    %v1564 = vld [vmem:[#allocation8 + $0x198] sm:$0xff]
    %v1565 = vld [vmem:[#allocation8 + $0x1a0] sm:$0xff]
    %v1566 = vld [vmem:[#allocation8 + $0x1a8] sm:$0xff]
    %v1567 = vld [vmem:[#allocation8 + $0x1b0] sm:$0xff]
    %v1568 = vld [vmem:[#allocation8 + $0x1b8] sm:$0xff]
    %v1569 = vld [vmem:[#allocation8 + $0x1c0] sm:$0xff]
    %v1570 = vld [vmem:[#allocation8 + $0x1c8] sm:$0xff]
    %v1571 = vld [vmem:[#allocation8 + $0x1d0] sm:$0xff]
    %v1572 = vld [vmem:[#allocation8 + $0x1d8] sm:$0xff]
    %v1573 = vld [vmem:[#allocation8 + $0x1e0] sm:$0xff]
    %v1574 = vld [vmem:[#allocation8 + $0x1e8] sm:$0xff]
    %v1575 = vld [vmem:[#allocation8 + $0x1f0] sm:$0xff]
    %v1576 = vld [vmem:[#allocation8 + $0x1f8] sm:$0xff]
    %v1577 = vld [vmem:[#allocation8 + $0x200] sm:$0xff]
    %v1578 = vld [vmem:[#allocation8 + $0x208] sm:$0xff]
    %v1579 = vld [vmem:[#allocation8 + $0x210] sm:$0xff]
    %v1580 = vld [vmem:[#allocation8 + $0x218] sm:$0xff]
    %v1581 = vld [vmem:[#allocation8 + $0x220] sm:$0xff]
    %v1582 = vld [vmem:[#allocation8 + $0x228] sm:$0xff]
    %v1583 = vld [vmem:[#allocation8 + $0x230] sm:$0xff]
    %v1584 = vld [vmem:[#allocation8 + $0x238] sm:$0xff]
    %v1585 = vld [vmem:[#allocation8 + $0x240] sm:$0xff]
    %v1586 = vld [vmem:[#allocation8 + $0x248] sm:$0xff]
    %v1587 = vld [vmem:[#allocation8 + $0x250] sm:$0xff]
    %v1588 = vld [vmem:[#allocation8 + $0x258] sm:$0xff]
    %v1589 = vld [vmem:[#allocation8 + $0x260] sm:$0xff]
    %v1590 = vld [vmem:[#allocation8 + $0x268] sm:$0xff]
    %v1591 = vld [vmem:[#allocation8 + $0x270] sm:$0xff]
    %v1592 = vld [vmem:[#allocation8 + $0x278] sm:$0xff]
    %v1593 = vld [vmem:[#allocation8 + $0x280] sm:$0xff]
    %v1594 = vld [vmem:[#allocation8 + $0x288] sm:$0xff]
    %v1595 = vld [vmem:[#allocation8 + $0x290] sm:$0xff]
    %v1596 = vld [vmem:[#allocation8 + $0x298] sm:$0xff]
    %v1597 = vld [vmem:[#allocation8 + $0x2a0] sm:$0xff]
    %v1598 = vld [vmem:[#allocation8 + $0x2a8] sm:$0xff]
    %v1599 = vld [vmem:[#allocation8 + $0x2b0] sm:$0xff]
    %v1600 = vld [vmem:[#allocation8 + $0x2b8] sm:$0xff]
    %v1601 = vld [vmem:[#allocation8 + $0x2c0] sm:$0xff]
    %v1602 = vld [vmem:[#allocation8 + $0x2c8] sm:$0xff]
    %v1603 = vld [vmem:[#allocation8 + $0x2d0] sm:$0xff]
    %v1604 = vld [vmem:[#allocation8 + $0x2d8] sm:$0xff]
    %v1605 = vld [vmem:[#allocation8 + $0x2e0] sm:$0xff]
    %v1606 = vld [vmem:[#allocation8 + $0x2e8] sm:$0xff]
    %v1607 = vld [vmem:[#allocation8 + $0x2f0] sm:$0xff]
    %v1608 = vld [vmem:[#allocation8 + $0x2f8] sm:$0xff]
    %v1609 = vld [vmem:[#allocation8 + $0x300] sm:$0xff]
    %v1610 = vld [vmem:[#allocation8 + $0x308] sm:$0xff]
    %v1611 = vld [vmem:[#allocation8 + $0x310] sm:$0xff]
    %v1612 = vld [vmem:[#allocation8 + $0x318] sm:$0xff]
    %v1613 = vld [vmem:[#allocation8 + $0x320] sm:$0xff]
    %v1614 = vld [vmem:[#allocation8 + $0x328] sm:$0xff]
    %v1615 = vld [vmem:[#allocation8 + $0x330] sm:$0xff]
    %v1616 = vld [vmem:[#allocation8 + $0x338] sm:$0xff]
    %v1617 = vld [vmem:[#allocation8 + $0x340] sm:$0xff]
    %v1618 = vld [vmem:[#allocation8 + $0x348] sm:$0xff]
    %v1619 = vld [vmem:[#allocation8 + $0x350] sm:$0xff]
    %v1620 = vld [vmem:[#allocation8 + $0x358] sm:$0xff]
    %v1621 = vld [vmem:[#allocation8 + $0x360] sm:$0xff]
    %v1622 = vld [vmem:[#allocation8 + $0x368] sm:$0xff]
    %v1623 = vld [vmem:[#allocation8 + $0x370] sm:$0xff]
    %v1624 = vld [vmem:[#allocation8 + $0x378] sm:$0xff]
    %v1625 = vld [vmem:[#allocation8 + $0x380] sm:$0xff]
    %v1626 = vld [vmem:[#allocation8 + $0x388] sm:$0xff]
    %v1627 = vld [vmem:[#allocation8 + $0x390] sm:$0xff]
    %v1628 = vld [vmem:[#allocation8 + $0x398] sm:$0xff]
    %v1629 = vld [vmem:[#allocation8 + $0x3a0] sm:$0xff]
    %v1630 = vld [vmem:[#allocation8 + $0x3a8] sm:$0xff]
    %v1631 = vld [vmem:[#allocation8 + $0x3b0] sm:$0xff]
    %v1632 = vld [vmem:[#allocation8 + $0x3b8] sm:$0xff]
    %v1633 = vld [vmem:[#allocation8 + $0x3c0] sm:$0xff]
    %v1634 = vld [vmem:[#allocation8 + $0x3c8] sm:$0xff]
    %v1635 = vld [vmem:[#allocation8 + $0x3d0] sm:$0xff]
    %v1636 = vld [vmem:[#allocation8 + $0x3d8] sm:$0xff]
    %v1637 = vld [vmem:[#allocation8 + $0x3e0] sm:$0xff]
    %v1638 = vld [vmem:[#allocation8 + $0x3e8] sm:$0xff]
    %v1639 = vld [vmem:[#allocation8 + $0x3f0] sm:$0xff]
    %v1640 = vld [vmem:[#allocation8 + $0x3f8] sm:$0xff]
    %v1669 = vunpack.c.l.b16 %v1443
    %v1670 = vunpack.c.h.b16 %v1443
    %v1671 = vunpack.c.l.b16 %v1444
    %v1672 = vunpack.c.h.b16 %v1444
    %v1673 = vunpack.c.l.b16 %v1445
    %v1674 = vunpack.c.h.b16 %v1445
    %v1675 = vunpack.c.l.b16 %v1446
    %v1676 = vunpack.c.h.b16 %v1446
    %v1677 = vunpack.c.l.b16 %v1447
    %v1678 = vunpack.c.h.b16 %v1447
    %v1679 = vunpack.c.l.b16 %v1448
    %v1680 = vunpack.c.h.b16 %v1448
    %v1681 = vunpack.c.l.b16 %v1449
    %v1682 = vunpack.c.h.b16 %v1449
    %v1683 = vunpack.c.l.b16 %v1450
    %v1684 = vunpack.c.h.b16 %v1450
    %v1685 = vunpack.c.l.b16 %v1451
    %v1686 = vunpack.c.h.b16 %v1451
    %v1687 = vunpack.c.l.b16 %v1452
    %v1688 = vunpack.c.h.b16 %v1452
    %v1689 = vunpack.c.l.b16 %v1453
    %v1690 = vunpack.c.h.b16 %v1453
    %v1691 = vunpack.c.l.b16 %v1454
    %v1692 = vunpack.c.h.b16 %v1454
    %v1693 = vunpack.c.l.b16 %v1455
    %v1694 = vunpack.c.h.b16 %v1455
    %v1695 = vunpack.c.l.b16 %v1456
    %v1696 = vunpack.c.h.b16 %v1456
    %v1697 = vunpack.c.l.b16 %v1457
    %v1698 = vunpack.c.h.b16 %v1457
    %v1699 = vunpack.c.l.b16 %v1458
    %v1700 = vunpack.c.h.b16 %v1458
    %v1701 = vunpack.c.l.b16 %v1459
    %v1702 = vunpack.c.h.b16 %v1459
    %v1703 = vunpack.c.l.b16 %v1460
    %v1704 = vunpack.c.h.b16 %v1460
    %v1705 = vunpack.c.l.b16 %v1461
    %v1706 = vunpack.c.h.b16 %v1461
    %v1707 = vunpack.c.l.b16 %v1462
    %v1708 = vunpack.c.h.b16 %v1462
    %v1709 = vunpack.c.l.b16 %v1463
    %v1710 = vunpack.c.h.b16 %v1463
    %v1711 = vunpack.c.l.b16 %v1464
    %v1712 = vunpack.c.h.b16 %v1464
    %v1713 = vunpack.c.l.b16 %v1465
    %v1714 = vunpack.c.h.b16 %v1465
    %v1715 = vunpack.c.l.b16 %v1466
    %v1716 = vunpack.c.h.b16 %v1466
    %v1717 = vunpack.c.l.b16 %v1467
    %v1718 = vunpack.c.h.b16 %v1467
    %v1719 = vunpack.c.l.b16 %v1468
    %v1720 = vunpack.c.h.b16 %v1468
    %v1721 = vunpack.c.l.b16 %v1469
    %v1722 = vunpack.c.h.b16 %v1469
    %v1723 = vunpack.c.l.b16 %v1470
    %v1724 = vunpack.c.h.b16 %v1470
    %v1725 = vpack.c.b16 %v1677, %v1669
    %v1726 = vpack.c.b16 %v1678, %v1670
    %v1727 = vpack.c.b16 %v1679, %v1671
    %v1728 = vpack.c.b16 %v1680, %v1672
    %v1729 = vpack.c.b16 %v1681, %v1673
    %v1730 = vpack.c.b16 %v1682, %v1674
    %v1731 = vpack.c.b16 %v1683, %v1675
    %v1732 = vpack.c.b16 %v1684, %v1676
    %v1733 = vpack.c.b16 %v1693, %v1685
    %v1734 = vpack.c.b16 %v1694, %v1686
    %v1735 = vpack.c.b16 %v1695, %v1687
    %v1736 = vpack.c.b16 %v1696, %v1688
    %v1737 = vpack.c.b16 %v1697, %v1689
    %v1738 = vpack.c.b16 %v1698, %v1690
    %v1739 = vpack.c.b16 %v1699, %v1691
    %v1740 = vpack.c.b16 %v1700, %v1692
    %v1741 = vpack.c.b16 %v1709, %v1701
    %v1742 = vpack.c.b16 %v1710, %v1702
    %v1743 = vpack.c.b16 %v1711, %v1703
    %v1744 = vpack.c.b16 %v1712, %v1704
    %v1745 = vpack.c.b16 %v1713, %v1705
    %v1746 = vpack.c.b16 %v1714, %v1706
    %v1747 = vpack.c.b16 %v1715, %v1707
    %v1748 = vpack.c.b16 %v1716, %v1708
    %v1749 = vpack.c.b16 %v1717, %v1717
    %v1750 = vpack.c.b16 %v1718, %v1718
    %v1751 = vpack.c.b16 %v1719, %v1719
    %v1752 = vpack.c.b16 %v1720, %v1720
    %v1753 = vpack.c.b16 %v1721, %v1721
    %v1754 = vpack.c.b16 %v1722, %v1722
    %v1755 = vpack.c.b16 %v1723, %v1723
    %v1756 = vpack.c.b16 %v1724, %v1724
    %v1917 = vunpack.c.l.b16 %v1513
    %v1918 = vunpack.c.h.b16 %v1513
    %v1919 = vunpack.c.l.b16 %v1514
    %v1920 = vunpack.c.h.b16 %v1514
    %v1921 = vunpack.c.l.b16 %v1515
    %v1922 = vunpack.c.h.b16 %v1515
    %v1923 = vunpack.c.l.b16 %v1516
    %v1924 = vunpack.c.h.b16 %v1516
    %v1925 = vunpack.c.l.b16 %v1517
    %v1926 = vunpack.c.h.b16 %v1517
    %v1927 = vunpack.c.l.b16 %v1518
    %v1928 = vunpack.c.h.b16 %v1518
    %v1929 = vunpack.c.l.b16 %v1519
    %v1930 = vunpack.c.h.b16 %v1519
    %v1931 = vunpack.c.l.b16 %v1520
    %v1932 = vunpack.c.h.b16 %v1520
    %v1933 = vunpack.c.l.b16 %v1521
    %v1934 = vunpack.c.h.b16 %v1521
    %v1935 = vunpack.c.l.b16 %v1522
    %v1936 = vunpack.c.h.b16 %v1522
    %v1937 = vunpack.c.l.b16 %v1523
    %v1938 = vunpack.c.h.b16 %v1523
    %v1939 = vunpack.c.l.b16 %v1524
    %v1940 = vunpack.c.h.b16 %v1524
    %v1941 = vunpack.c.l.b16 %v1525
    %v1942 = vunpack.c.h.b16 %v1525
    %v1943 = vunpack.c.l.b16 %v1526
    %v1944 = vunpack.c.h.b16 %v1526
    %v1945 = vunpack.c.l.b16 %v1527
    %v1946 = vunpack.c.h.b16 %v1527
    %v1947 = vunpack.c.l.b16 %v1528
    %v1948 = vunpack.c.h.b16 %v1528
    %v1949 = vunpack.c.l.b16 %v1529
    %v1950 = vunpack.c.h.b16 %v1529
    %v1951 = vunpack.c.l.b16 %v1530
    %v1952 = vunpack.c.h.b16 %v1530
    %v1953 = vunpack.c.l.b16 %v1531
    %v1954 = vunpack.c.h.b16 %v1531
    %v1955 = vunpack.c.l.b16 %v1532
    %v1956 = vunpack.c.h.b16 %v1532
    %v1957 = vunpack.c.l.b16 %v1533
    %v1958 = vunpack.c.h.b16 %v1533
    %v1959 = vunpack.c.l.b16 %v1534
    %v1960 = vunpack.c.h.b16 %v1534
    %v1961 = vunpack.c.l.b16 %v1535
    %v1962 = vunpack.c.h.b16 %v1535
    %v1963 = vunpack.c.l.b16 %v1536
    %v1964 = vunpack.c.h.b16 %v1536
    %v1965 = vunpack.c.l.b16 %v1537
    %v1966 = vunpack.c.h.b16 %v1537
    %v1967 = vunpack.c.l.b16 %v1538
    %v1968 = vunpack.c.h.b16 %v1538
    %v1969 = vunpack.c.l.b16 %v1539
    %v1970 = vunpack.c.h.b16 %v1539
    %v1971 = vunpack.c.l.b16 %v1540
    %v1972 = vunpack.c.h.b16 %v1540
    %v1973 = vunpack.c.l.b16 %v1541
    %v1974 = vunpack.c.h.b16 %v1541
    %v1975 = vunpack.c.l.b16 %v1542
    %v1976 = vunpack.c.h.b16 %v1542
    %v1977 = vunpack.c.l.b16 %v1543
    %v1978 = vunpack.c.h.b16 %v1543
    %v1979 = vunpack.c.l.b16 %v1544
    %v1980 = vunpack.c.h.b16 %v1544
    %v1981 = vunpack.c.l.b16 %v1545
    %v1982 = vunpack.c.h.b16 %v1545
    %v1983 = vunpack.c.l.b16 %v1546
    %v1984 = vunpack.c.h.b16 %v1546
    %v1985 = vunpack.c.l.b16 %v1547
    %v1986 = vunpack.c.h.b16 %v1547
    %v1987 = vunpack.c.l.b16 %v1548
    %v1988 = vunpack.c.h.b16 %v1548
    %v1989 = vunpack.c.l.b16 %v1549
    %v1990 = vunpack.c.h.b16 %v1549
    %v1991 = vunpack.c.l.b16 %v1550
    %v1992 = vunpack.c.h.b16 %v1550
    %v1993 = vunpack.c.l.b16 %v1551
    %v1994 = vunpack.c.h.b16 %v1551
    %v1995 = vunpack.c.l.b16 %v1552
    %v1996 = vunpack.c.h.b16 %v1552
    %v1997 = vunpack.c.l.b16 %v1553
    %v1998 = vunpack.c.h.b16 %v1553
    %v1999 = vunpack.c.l.b16 %v1554
    %v2000 = vunpack.c.h.b16 %v1554
    %v2001 = vunpack.c.l.b16 %v1555
    %v2002 = vunpack.c.h.b16 %v1555
    %v2003 = vunpack.c.l.b16 %v1556
    %v2004 = vunpack.c.h.b16 %v1556
    %v2005 = vunpack.c.l.b16 %v1557
    %v2006 = vunpack.c.h.b16 %v1557
    %v2007 = vunpack.c.l.b16 %v1558
    %v2008 = vunpack.c.h.b16 %v1558
    %v2009 = vunpack.c.l.b16 %v1559
    %v2010 = vunpack.c.h.b16 %v1559
    %v2011 = vunpack.c.l.b16 %v1560
    %v2012 = vunpack.c.h.b16 %v1560
    %v2013 = vunpack.c.l.b16 %v1561
    %v2014 = vunpack.c.h.b16 %v1561
    %v2015 = vunpack.c.l.b16 %v1562
    %v2016 = vunpack.c.h.b16 %v1562
    %v2017 = vunpack.c.l.b16 %v1563
    %v2018 = vunpack.c.h.b16 %v1563
    %v2019 = vunpack.c.l.b16 %v1564
    %v2020 = vunpack.c.h.b16 %v1564
    %v2021 = vunpack.c.l.b16 %v1565
    %v2022 = vunpack.c.h.b16 %v1565
    %v2023 = vunpack.c.l.b16 %v1566
    %v2024 = vunpack.c.h.b16 %v1566
    %v2025 = vunpack.c.l.b16 %v1567
    %v2026 = vunpack.c.h.b16 %v1567
    %v2027 = vunpack.c.l.b16 %v1568
    %v2028 = vunpack.c.h.b16 %v1568
    %v2029 = vunpack.c.l.b16 %v1569
    %v2030 = vunpack.c.h.b16 %v1569
    %v2031 = vunpack.c.l.b16 %v1570
    %v2032 = vunpack.c.h.b16 %v1570
    %v2033 = vunpack.c.l.b16 %v1571
    %v2034 = vunpack.c.h.b16 %v1571
    %v2035 = vunpack.c.l.b16 %v1572
    %v2036 = vunpack.c.h.b16 %v1572
    %v2037 = vunpack.c.l.b16 %v1573
    %v2038 = vunpack.c.h.b16 %v1573
    %v2039 = vunpack.c.l.b16 %v1574
    %v2040 = vunpack.c.h.b16 %v1574
    %v2041 = vunpack.c.l.b16 %v1575
    %v2042 = vunpack.c.h.b16 %v1575
    %v2043 = vunpack.c.l.b16 %v1576
    %v2044 = vunpack.c.h.b16 %v1576
    %v2045 = vunpack.c.l.b16 %v1577
    %v2046 = vunpack.c.h.b16 %v1577
    %v2047 = vunpack.c.l.b16 %v1578
    %v2048 = vunpack.c.h.b16 %v1578
    %v2049 = vunpack.c.l.b16 %v1579
    %v2050 = vunpack.c.h.b16 %v1579
    %v2051 = vunpack.c.l.b16 %v1580
    %v2052 = vunpack.c.h.b16 %v1580
    %v2053 = vunpack.c.l.b16 %v1581
    %v2054 = vunpack.c.h.b16 %v1581
    %v2055 = vunpack.c.l.b16 %v1582
    %v2056 = vunpack.c.h.b16 %v1582
    %v2057 = vunpack.c.l.b16 %v1583
    %v2058 = vunpack.c.h.b16 %v1583
    %v2059 = vunpack.c.l.b16 %v1584
    %v2060 = vunpack.c.h.b16 %v1584
    %v2061 = vunpack.c.l.b16 %v1585
    %v2062 = vunpack.c.h.b16 %v1585
    %v2063 = vunpack.c.l.b16 %v1586
    %v2064 = vunpack.c.h.b16 %v1586
    %v2065 = vunpack.c.l.b16 %v1587
    %v2066 = vunpack.c.h.b16 %v1587
    %v2067 = vunpack.c.l.b16 %v1588
    %v2068 = vunpack.c.h.b16 %v1588
    %v2069 = vunpack.c.l.b16 %v1589
    %v2070 = vunpack.c.h.b16 %v1589
    %v2071 = vunpack.c.l.b16 %v1590
    %v2072 = vunpack.c.h.b16 %v1590
    %v2073 = vunpack.c.l.b16 %v1591
    %v2074 = vunpack.c.h.b16 %v1591
    %v2075 = vunpack.c.l.b16 %v1592
    %v2076 = vunpack.c.h.b16 %v1592
    %v2077 = vunpack.c.l.b16 %v1593
    %v2078 = vunpack.c.h.b16 %v1593
    %v2079 = vunpack.c.l.b16 %v1594
    %v2080 = vunpack.c.h.b16 %v1594
    %v2081 = vunpack.c.l.b16 %v1595
    %v2082 = vunpack.c.h.b16 %v1595
    %v2083 = vunpack.c.l.b16 %v1596
    %v2084 = vunpack.c.h.b16 %v1596
    %v2085 = vunpack.c.l.b16 %v1597
    %v2086 = vunpack.c.h.b16 %v1597
    %v2087 = vunpack.c.l.b16 %v1598
    %v2088 = vunpack.c.h.b16 %v1598
    %v2089 = vunpack.c.l.b16 %v1599
    %v2090 = vunpack.c.h.b16 %v1599
    %v2091 = vunpack.c.l.b16 %v1600
    %v2092 = vunpack.c.h.b16 %v1600
    %v2093 = vunpack.c.l.b16 %v1601
    %v2094 = vunpack.c.h.b16 %v1601
    %v2095 = vunpack.c.l.b16 %v1602
    %v2096 = vunpack.c.h.b16 %v1602
    %v2097 = vunpack.c.l.b16 %v1603
    %v2098 = vunpack.c.h.b16 %v1603
    %v2099 = vunpack.c.l.b16 %v1604
    %v2100 = vunpack.c.h.b16 %v1604
    %v2101 = vunpack.c.l.b16 %v1605
    %v2102 = vunpack.c.h.b16 %v1605
    %v2103 = vunpack.c.l.b16 %v1606
    %v2104 = vunpack.c.h.b16 %v1606
    %v2105 = vunpack.c.l.b16 %v1607
    %v2106 = vunpack.c.h.b16 %v1607
    %v2107 = vunpack.c.l.b16 %v1608
    %v2108 = vunpack.c.h.b16 %v1608
    %v2109 = vunpack.c.l.b16 %v1609
    %v2110 = vunpack.c.h.b16 %v1609
    %v2111 = vunpack.c.l.b16 %v1610
    %v2112 = vunpack.c.h.b16 %v1610
    %v2113 = vunpack.c.l.b16 %v1611
    %v2114 = vunpack.c.h.b16 %v1611
    %v2115 = vunpack.c.l.b16 %v1612
    %v2116 = vunpack.c.h.b16 %v1612
    %v2117 = vunpack.c.l.b16 %v1613
    %v2118 = vunpack.c.h.b16 %v1613
    %v2119 = vunpack.c.l.b16 %v1614
    %v2120 = vunpack.c.h.b16 %v1614
    %v2121 = vunpack.c.l.b16 %v1615
    %v2122 = vunpack.c.h.b16 %v1615
    %v2123 = vunpack.c.l.b16 %v1616
    %v2124 = vunpack.c.h.b16 %v1616
    %v2125 = vunpack.c.l.b16 %v1617
    %v2126 = vunpack.c.h.b16 %v1617
    %v2127 = vunpack.c.l.b16 %v1618
    %v2128 = vunpack.c.h.b16 %v1618
    %v2129 = vunpack.c.l.b16 %v1619
    %v2130 = vunpack.c.h.b16 %v1619
    %v2131 = vunpack.c.l.b16 %v1620
    %v2132 = vunpack.c.h.b16 %v1620
    %v2133 = vunpack.c.l.b16 %v1621
    %v2134 = vunpack.c.h.b16 %v1621
    %v2135 = vunpack.c.l.b16 %v1622
    %v2136 = vunpack.c.h.b16 %v1622
    %v2137 = vunpack.c.l.b16 %v1623
    %v2138 = vunpack.c.h.b16 %v1623
    %v2139 = vunpack.c.l.b16 %v1624
    %v2140 = vunpack.c.h.b16 %v1624
    %v2141 = vunpack.c.l.b16 %v1625
    %v2142 = vunpack.c.h.b16 %v1625
    %v2143 = vunpack.c.l.b16 %v1626
    %v2144 = vunpack.c.h.b16 %v1626
    %v2145 = vunpack.c.l.b16 %v1627
    %v2146 = vunpack.c.h.b16 %v1627
    %v2147 = vunpack.c.l.b16 %v1628
    %v2148 = vunpack.c.h.b16 %v1628
    %v2149 = vunpack.c.l.b16 %v1629
    %v2150 = vunpack.c.h.b16 %v1629
    %v2151 = vunpack.c.l.b16 %v1630
    %v2152 = vunpack.c.h.b16 %v1630
    %v2153 = vunpack.c.l.b16 %v1631
    %v2154 = vunpack.c.h.b16 %v1631
    %v2155 = vunpack.c.l.b16 %v1632
    %v2156 = vunpack.c.h.b16 %v1632
    %v2157 = vunpack.c.l.b16 %v1633
    %v2158 = vunpack.c.h.b16 %v1633
    %v2159 = vunpack.c.l.b16 %v1634
    %v2160 = vunpack.c.h.b16 %v1634
    %v2161 = vunpack.c.l.b16 %v1635
    %v2162 = vunpack.c.h.b16 %v1635
    %v2163 = vunpack.c.l.b16 %v1636
    %v2164 = vunpack.c.h.b16 %v1636
    %v2165 = vunpack.c.l.b16 %v1637
    %v2166 = vunpack.c.h.b16 %v1637
    %v2167 = vunpack.c.l.b16 %v1638
    %v2168 = vunpack.c.h.b16 %v1638
    %v2169 = vunpack.c.l.b16 %v1639
    %v2170 = vunpack.c.h.b16 %v1639
    %v2171 = vunpack.c.l.b16 %v1640
    %v2172 = vunpack.c.h.b16 %v1640
    %v2173 = vpack.c.b16 %v1919, %v1917
    %v2174 = vpack.c.b16 %v1920, %v1918
    %v2175 = vpack.c.b16 %v1923, %v1921
    %v2176 = vpack.c.b16 %v1924, %v1922
    %v2177 = vpack.c.b16 %v1927, %v1925
    %v2178 = vpack.c.b16 %v1928, %v1926
    %v2179 = vpack.c.b16 %v1931, %v1929
    %v2180 = vpack.c.b16 %v1932, %v1930
    %v2181 = vpack.c.b16 %v1935, %v1933
    %v2182 = vpack.c.b16 %v1936, %v1934
    %v2183 = vpack.c.b16 %v1939, %v1937
    %v2184 = vpack.c.b16 %v1940, %v1938
    %v2185 = vpack.c.b16 %v1943, %v1941
    %v2186 = vpack.c.b16 %v1944, %v1942
    %v2187 = vpack.c.b16 %v1947, %v1945
    %v2188 = vpack.c.b16 %v1948, %v1946
    %v2189 = vpack.c.b16 %v1951, %v1949
    %v2190 = vpack.c.b16 %v1952, %v1950
    %v2191 = vpack.c.b16 %v1955, %v1953
    %v2192 = vpack.c.b16 %v1956, %v1954
    %v2193 = vpack.c.b16 %v1959, %v1957
    %v2194 = vpack.c.b16 %v1960, %v1958
    %v2195 = vpack.c.b16 %v1963, %v1961
    %v2196 = vpack.c.b16 %v1964, %v1962
    %v2197 = vpack.c.b16 %v1967, %v1965
    %v2198 = vpack.c.b16 %v1968, %v1966
    %v2199 = vpack.c.b16 %v1971, %v1969
    %v2200 = vpack.c.b16 %v1972, %v1970
    %v2201 = vpack.c.b16 %v1975, %v1973
    %v2202 = vpack.c.b16 %v1976, %v1974
    %v2203 = vpack.c.b16 %v1979, %v1977
    %v2204 = vpack.c.b16 %v1980, %v1978
    %v2205 = vpack.c.b16 %v1983, %v1981
    %v2206 = vpack.c.b16 %v1984, %v1982
    %v2207 = vpack.c.b16 %v1987, %v1985
    %v2208 = vpack.c.b16 %v1988, %v1986
    %v2209 = vpack.c.b16 %v1991, %v1989
    %v2210 = vpack.c.b16 %v1992, %v1990
    %v2211 = vpack.c.b16 %v1995, %v1993
    %v2212 = vpack.c.b16 %v1996, %v1994
    %v2213 = vpack.c.b16 %v1999, %v1997
    %v2214 = vpack.c.b16 %v2000, %v1998
    %v2215 = vpack.c.b16 %v2003, %v2001
    %v2216 = vpack.c.b16 %v2004, %v2002
    %v2217 = vpack.c.b16 %v2007, %v2005
    %v2218 = vpack.c.b16 %v2008, %v2006
    %v2219 = vpack.c.b16 %v2011, %v2009
    %v2220 = vpack.c.b16 %v2012, %v2010
    %v2221 = vpack.c.b16 %v2015, %v2013
    %v2222 = vpack.c.b16 %v2016, %v2014
    %v2223 = vpack.c.b16 %v2019, %v2017
    %v2224 = vpack.c.b16 %v2020, %v2018
    %v2225 = vpack.c.b16 %v2023, %v2021
    %v2226 = vpack.c.b16 %v2024, %v2022
    %v2227 = vpack.c.b16 %v2027, %v2025
    %v2228 = vpack.c.b16 %v2028, %v2026
    %v2229 = vpack.c.b16 %v2031, %v2029
    %v2230 = vpack.c.b16 %v2032, %v2030
    %v2231 = vpack.c.b16 %v2035, %v2033
    %v2232 = vpack.c.b16 %v2036, %v2034
    %v2233 = vpack.c.b16 %v2039, %v2037
    %v2234 = vpack.c.b16 %v2040, %v2038
    %v2235 = vpack.c.b16 %v2043, %v2041
    %v2236 = vpack.c.b16 %v2044, %v2042
    %v2237 = vpack.c.b16 %v2047, %v2045
    %v2238 = vpack.c.b16 %v2048, %v2046
    %v2239 = vpack.c.b16 %v2051, %v2049
    %v2240 = vpack.c.b16 %v2052, %v2050
    %v2241 = vpack.c.b16 %v2055, %v2053
    %v2242 = vpack.c.b16 %v2056, %v2054
    %v2243 = vpack.c.b16 %v2059, %v2057
    %v2244 = vpack.c.b16 %v2060, %v2058
    %v2245 = vpack.c.b16 %v2063, %v2061
    %v2246 = vpack.c.b16 %v2064, %v2062
    %v2247 = vpack.c.b16 %v2067, %v2065
    %v2248 = vpack.c.b16 %v2068, %v2066
    %v2249 = vpack.c.b16 %v2071, %v2069
    %v2250 = vpack.c.b16 %v2072, %v2070
    %v2251 = vpack.c.b16 %v2075, %v2073
    %v2252 = vpack.c.b16 %v2076, %v2074
    %v2253 = vpack.c.b16 %v2079, %v2077
    %v2254 = vpack.c.b16 %v2080, %v2078
    %v2255 = vpack.c.b16 %v2083, %v2081
    %v2256 = vpack.c.b16 %v2084, %v2082
    %v2257 = vpack.c.b16 %v2087, %v2085
    %v2258 = vpack.c.b16 %v2088, %v2086
    %v2259 = vpack.c.b16 %v2091, %v2089
    %v2260 = vpack.c.b16 %v2092, %v2090
    %v2261 = vpack.c.b16 %v2095, %v2093
    %v2262 = vpack.c.b16 %v2096, %v2094
    %v2263 = vpack.c.b16 %v2099, %v2097
    %v2264 = vpack.c.b16 %v2100, %v2098
    %v2265 = vpack.c.b16 %v2103, %v2101
    %v2266 = vpack.c.b16 %v2104, %v2102
    %v2267 = vpack.c.b16 %v2107, %v2105
    %v2268 = vpack.c.b16 %v2108, %v2106
    %v2269 = vpack.c.b16 %v2111, %v2109
    %v2270 = vpack.c.b16 %v2112, %v2110
    %v2271 = vpack.c.b16 %v2115, %v2113
    %v2272 = vpack.c.b16 %v2116, %v2114
    %v2273 = vpack.c.b16 %v2119, %v2117
    %v2274 = vpack.c.b16 %v2120, %v2118
    %v2275 = vpack.c.b16 %v2123, %v2121
    %v2276 = vpack.c.b16 %v2124, %v2122
    %v2277 = vpack.c.b16 %v2127, %v2125
    %v2278 = vpack.c.b16 %v2128, %v2126
    %v2279 = vpack.c.b16 %v2131, %v2129
    %v2280 = vpack.c.b16 %v2132, %v2130
    %v2281 = vpack.c.b16 %v2135, %v2133
    %v2282 = vpack.c.b16 %v2136, %v2134
    %v2283 = vpack.c.b16 %v2139, %v2137
    %v2284 = vpack.c.b16 %v2140, %v2138
    %v2285 = vpack.c.b16 %v2143, %v2141
    %v2286 = vpack.c.b16 %v2144, %v2142
    %v2287 = vpack.c.b16 %v2147, %v2145
    %v2288 = vpack.c.b16 %v2148, %v2146
    %v2289 = vpack.c.b16 %v2151, %v2149
    %v2290 = vpack.c.b16 %v2152, %v2150
    %v2291 = vpack.c.b16 %v2155, %v2153
    %v2292 = vpack.c.b16 %v2156, %v2154
    %v2293 = vpack.c.b16 %v2159, %v2157
    %v2294 = vpack.c.b16 %v2160, %v2158
    %v2295 = vpack.c.b16 %v2163, %v2161
    %v2296 = vpack.c.b16 %v2164, %v2162
    %v2297 = vpack.c.b16 %v2167, %v2165
    %v2298 = vpack.c.b16 %v2168, %v2166
    %v2299 = vpack.c.b16 %v2171, %v2169
    %v2300 = vpack.c.b16 %v2172, %v2170
    %2429 = vmatpush.bf16.msra.mxu0 %v2187
    %2430 = vmatpush.bf16.msra.mxu0 %v2185
    %2431 = vmatpush.bf16.msra.mxu0 %v2183
    %2432 = vmatpush.bf16.msra.mxu0 %v2181
    %2433 = vmatpush.bf16.msra.mxu0 %v2179
    %2434 = vmatpush.bf16.msra.mxu0 %v2177
    %2435 = vmatpush.bf16.msra.mxu0 %v2175
    %2436 = vmatpush.bf16.msra.mxu0 %v2173
    %2437 = vmatmul.bf16.gmra.mxu0 %v1725
    %v2438 = vpop.f32.mrf.mxu0
    %v2439 = vadd.f32 0.0, %v2438
    %v2440 = vpop.f32.mrf.mxu0
    %v2441 = vadd.f32 0.0, %v2440
    %2442 = vmatmul.bf16.gmra.mxu0 %v1733
    %v2443 = vpop.f32.mrf.mxu0
    %v2444 = vadd.f32 0.0, %v2443
    %v2445 = vpop.f32.mrf.mxu0
    %v2446 = vadd.f32 0.0, %v2445
    %2447 = vmatmul.bf16.gmra.mxu0 %v1741
    %v2448 = vpop.f32.mrf.mxu0
    %v2449 = vadd.f32 0.0, %v2448
    %v2450 = vpop.f32.mrf.mxu0
    %v2451 = vadd.f32 0.0, %v2450
    %2452 = vmatmul.bf16.gmra.mxu0 %v1749
    %v2453 = vpop.f32.mrf.mxu0
    %v2454 = vadd.f32 0.0, %v2453
    %v2455 = vpop.f32.mrf.mxu0
    %2456 = vdwg.mxu0
    %2457 = vmatpush.bf16.msra.mxu0 %v2203
    %2458 = vmatpush.bf16.msra.mxu0 %v2201
    %2459 = vmatpush.bf16.msra.mxu0 %v2199
    %2460 = vmatpush.bf16.msra.mxu0 %v2197
    %2461 = vmatpush.bf16.msra.mxu0 %v2195
    %2462 = vmatpush.bf16.msra.mxu0 %v2193
    %2463 = vmatpush.bf16.msra.mxu0 %v2191
    %2464 = vmatpush.bf16.msra.mxu0 %v2189
    %2465 = vmatmul.bf16.gmra.mxu0 %v1726
    %v2466 = vpop.f32.mrf.mxu0
    %v2467 = vadd.f32 %v2439, %v2466
    %v2468 = vpop.f32.mrf.mxu0
    %v2469 = vadd.f32 %v2441, %v2468
    %2470 = vmatmul.bf16.gmra.mxu0 %v1734
    %v2471 = vpop.f32.mrf.mxu0
    %v2472 = vadd.f32 %v2444, %v2471
    %v2473 = vpop.f32.mrf.mxu0
    %v2474 = vadd.f32 %v2446, %v2473
    %2475 = vmatmul.bf16.gmra.mxu0 %v1742
    %v2476 = vpop.f32.mrf.mxu0
    %v2477 = vadd.f32 %v2449, %v2476
    %v2478 = vpop.f32.mrf.mxu0
    %v2479 = vadd.f32 %v2451, %v2478
    %2480 = vmatmul.bf16.gmra.mxu0 %v1750
    %v2481 = vpop.f32.mrf.mxu0
    %v2482 = vadd.f32 %v2454, %v2481
    %v2483 = vpop.f32.mrf.mxu0
    %2484 = vdwg.mxu0
    %2485 = vmatpush.bf16.msra.mxu0 %v2219
    %2486 = vmatpush.bf16.msra.mxu0 %v2217
    %2487 = vmatpush.bf16.msra.mxu0 %v2215
    %2488 = vmatpush.bf16.msra.mxu0 %v2213
    %2489 = vmatpush.bf16.msra.mxu0 %v2211
    %2490 = vmatpush.bf16.msra.mxu0 %v2209
    %2491 = vmatpush.bf16.msra.mxu0 %v2207
    %2492 = vmatpush.bf16.msra.mxu0 %v2205
    %2493 = vmatmul.bf16.gmra.mxu0 %v1727
    %v2494 = vpop.f32.mrf.mxu0
    %v2495 = vadd.f32 %v2467, %v2494
    %v2496 = vpop.f32.mrf.mxu0
    %v2497 = vadd.f32 %v2469, %v2496
    %2498 = vmatmul.bf16.gmra.mxu0 %v1735
    %v2499 = vpop.f32.mrf.mxu0
    %v2500 = vadd.f32 %v2472, %v2499
    %v2501 = vpop.f32.mrf.mxu0
    %v2502 = vadd.f32 %v2474, %v2501
    %2503 = vmatmul.bf16.gmra.mxu0 %v1743
    %v2504 = vpop.f32.mrf.mxu0
    %v2505 = vadd.f32 %v2477, %v2504
    %v2506 = vpop.f32.mrf.mxu0
    %v2507 = vadd.f32 %v2479, %v2506
    %2508 = vmatmul.bf16.gmra.mxu0 %v1751
    %v2509 = vpop.f32.mrf.mxu0
    %v2510 = vadd.f32 %v2482, %v2509
    %v2511 = vpop.f32.mrf.mxu0
    %2512 = vdwg.mxu0
    %2513 = vmatpush.bf16.msra.mxu0 %v2235
    %2514 = vmatpush.bf16.msra.mxu0 %v2233
    %2515 = vmatpush.bf16.msra.mxu0 %v2231
    %2516 = vmatpush.bf16.msra.mxu0 %v2229
    %2517 = vmatpush.bf16.msra.mxu0 %v2227
    %2518 = vmatpush.bf16.msra.mxu0 %v2225
    %2519 = vmatpush.bf16.msra.mxu0 %v2223
    %2520 = vmatpush.bf16.msra.mxu0 %v2221
    %2521 = vmatmul.bf16.gmra.mxu0 %v1728
    %v2522 = vpop.f32.mrf.mxu0
    %v2523 = vadd.f32 %v2495, %v2522
    %v2524 = vpop.f32.mrf.mxu0
    %v2525 = vadd.f32 %v2497, %v2524
    %2526 = vmatmul.bf16.gmra.mxu0 %v1736
    %v2527 = vpop.f32.mrf.mxu0
    %v2528 = vadd.f32 %v2500, %v2527
    %v2529 = vpop.f32.mrf.mxu0
    %v2530 = vadd.f32 %v2502, %v2529
    %2531 = vmatmul.bf16.gmra.mxu0 %v1744
    %v2532 = vpop.f32.mrf.mxu0
    %v2533 = vadd.f32 %v2505, %v2532
    %v2534 = vpop.f32.mrf.mxu0
    %v2535 = vadd.f32 %v2507, %v2534
    %2536 = vmatmul.bf16.gmra.mxu0 %v1752
    %v2537 = vpop.f32.mrf.mxu0
    %v2538 = vadd.f32 %v2510, %v2537
    %v2539 = vpop.f32.mrf.mxu0
    %2540 = vdwg.mxu0
    %2541 = vmatpush.bf16.msra.mxu0 %v2251
    %2542 = vmatpush.bf16.msra.mxu0 %v2249
    %2543 = vmatpush.bf16.msra.mxu0 %v2247
    %2544 = vmatpush.bf16.msra.mxu0 %v2245
    %2545 = vmatpush.bf16.msra.mxu0 %v2243
    %2546 = vmatpush.bf16.msra.mxu0 %v2241
    %2547 = vmatpush.bf16.msra.mxu0 %v2239
    %2548 = vmatpush.bf16.msra.mxu0 %v2237
    %2549 = vmatmul.bf16.gmra.mxu0 %v1729
    %v2550 = vpop.f32.mrf.mxu0
    %v2551 = vadd.f32 %v2523, %v2550
    %v2552 = vpop.f32.mrf.mxu0
    %v2553 = vadd.f32 %v2525, %v2552
    %2554 = vmatmul.bf16.gmra.mxu0 %v1737
    %v2555 = vpop.f32.mrf.mxu0
    %v2556 = vadd.f32 %v2528, %v2555
    %v2557 = vpop.f32.mrf.mxu0
    %v2558 = vadd.f32 %v2530, %v2557
    %2559 = vmatmul.bf16.gmra.mxu0 %v1745
    %v2560 = vpop.f32.mrf.mxu0
    %v2561 = vadd.f32 %v2533, %v2560
    %v2562 = vpop.f32.mrf.mxu0
    %v2563 = vadd.f32 %v2535, %v2562
    %2564 = vmatmul.bf16.gmra.mxu0 %v1753
    %v2565 = vpop.f32.mrf.mxu0
    %v2566 = vadd.f32 %v2538, %v2565
    %v2567 = vpop.f32.mrf.mxu0
    %2568 = vdwg.mxu0
    %2569 = vmatpush.bf16.msra.mxu0 %v2267
    %2570 = vmatpush.bf16.msra.mxu0 %v2265
    %2571 = vmatpush.bf16.msra.mxu0 %v2263
    %2572 = vmatpush.bf16.msra.mxu0 %v2261
    %2573 = vmatpush.bf16.msra.mxu0 %v2259
    %2574 = vmatpush.bf16.msra.mxu0 %v2257
    %2575 = vmatpush.bf16.msra.mxu0 %v2255
    %2576 = vmatpush.bf16.msra.mxu0 %v2253
    %2577 = vmatmul.bf16.gmra.mxu0 %v1730
    %v2578 = vpop.f32.mrf.mxu0
    %v2579 = vadd.f32 %v2551, %v2578
    %v2580 = vpop.f32.mrf.mxu0
    %v2581 = vadd.f32 %v2553, %v2580
    %2582 = vmatmul.bf16.gmra.mxu0 %v1738
    %v2583 = vpop.f32.mrf.mxu0
    %v2584 = vadd.f32 %v2556, %v2583
    %v2585 = vpop.f32.mrf.mxu0
    %v2586 = vadd.f32 %v2558, %v2585
    %2587 = vmatmul.bf16.gmra.mxu0 %v1746
    %v2588 = vpop.f32.mrf.mxu0
    %v2589 = vadd.f32 %v2561, %v2588
    %v2590 = vpop.f32.mrf.mxu0
    %v2591 = vadd.f32 %v2563, %v2590
    %2592 = vmatmul.bf16.gmra.mxu0 %v1754
    %v2593 = vpop.f32.mrf.mxu0
    %v2594 = vadd.f32 %v2566, %v2593
    %v2595 = vpop.f32.mrf.mxu0
    %2596 = vdwg.mxu0
    %2597 = vmatpush.bf16.msra.mxu0 %v2283
    %2598 = vmatpush.bf16.msra.mxu0 %v2281
    %2599 = vmatpush.bf16.msra.mxu0 %v2279
    %2600 = vmatpush.bf16.msra.mxu0 %v2277
    %2601 = vmatpush.bf16.msra.mxu0 %v2275
    %2602 = vmatpush.bf16.msra.mxu0 %v2273
    %2603 = vmatpush.bf16.msra.mxu0 %v2271
    %2604 = vmatpush.bf16.msra.mxu0 %v2269
    %2605 = vmatmul.bf16.gmra.mxu0 %v1731
    %v2606 = vpop.f32.mrf.mxu0
    %v2607 = vadd.f32 %v2579, %v2606
    %v2608 = vpop.f32.mrf.mxu0
    %v2609 = vadd.f32 %v2581, %v2608
    %2610 = vmatmul.bf16.gmra.mxu0 %v1739
    %v2611 = vpop.f32.mrf.mxu0
    %v2612 = vadd.f32 %v2584, %v2611
    %v2613 = vpop.f32.mrf.mxu0
    %v2614 = vadd.f32 %v2586, %v2613
    %2615 = vmatmul.bf16.gmra.mxu0 %v1747
    %v2616 = vpop.f32.mrf.mxu0
    %v2617 = vadd.f32 %v2589, %v2616
    %v2618 = vpop.f32.mrf.mxu0
    %v2619 = vadd.f32 %v2591, %v2618
    %2620 = vmatmul.bf16.gmra.mxu0 %v1755
    %v2621 = vpop.f32.mrf.mxu0
    %v2622 = vadd.f32 %v2594, %v2621
    %v2623 = vpop.f32.mrf.mxu0
    %2624 = vdwg.mxu0
    %2625 = vmatpush.bf16.msra.mxu0 %v2299
    %2626 = vmatpush.bf16.msra.mxu0 %v2297
    %2627 = vmatpush.bf16.msra.mxu0 %v2295
    %2628 = vmatpush.bf16.msra.mxu0 %v2293
    %2629 = vmatpush.bf16.msra.mxu0 %v2291
    %2630 = vmatpush.bf16.msra.mxu0 %v2289
    %2631 = vmatpush.bf16.msra.mxu0 %v2287
    %2632 = vmatpush.bf16.msra.mxu0 %v2285
    %2633 = vmatmul.bf16.gmra.mxu0 %v1732
    %v2634 = vpop.f32.mrf.mxu0
    %v2635 = vadd.f32 %v2607, %v2634
    %v2636 = vpop.f32.mrf.mxu0
    %v2637 = vadd.f32 %v2609, %v2636
    %2638 = vmatmul.bf16.gmra.mxu0 %v1740
    %v2639 = vpop.f32.mrf.mxu0
    %v2640 = vadd.f32 %v2612, %v2639
    %v2641 = vpop.f32.mrf.mxu0
    %v2642 = vadd.f32 %v2614, %v2641
    %2643 = vmatmul.bf16.gmra.mxu0 %v1748
    %v2644 = vpop.f32.mrf.mxu0
    %v2645 = vadd.f32 %v2617, %v2644
    %v2646 = vpop.f32.mrf.mxu0
    %v2647 = vadd.f32 %v2619, %v2646
    %2648 = vmatmul.bf16.gmra.mxu0 %v1756
    %v2649 = vpop.f32.mrf.mxu0
    %v2650 = vadd.f32 %v2622, %v2649
    %v2651 = vpop.f32.mrf.mxu0
    %2652 = vdwg.mxu0
    %2653 = vmatpush.bf16.msra.mxu0 %v2188
    %2654 = vmatpush.bf16.msra.mxu0 %v2186
    %2655 = vmatpush.bf16.msra.mxu0 %v2184
    %2656 = vmatpush.bf16.msra.mxu0 %v2182
    %2657 = vmatpush.bf16.msra.mxu0 %v2180
    %2658 = vmatpush.bf16.msra.mxu0 %v2178
    %2659 = vmatpush.bf16.msra.mxu0 %v2176
    %2660 = vmatpush.bf16.msra.mxu0 %v2174
    %2661 = vmatmul.bf16.gmra.mxu0 %v1725
    %v2662 = vpop.f32.mrf.mxu0
    %v2663 = vadd.f32 0.0, %v2662
    %v2664 = vpop.f32.mrf.mxu0
    %v2665 = vadd.f32 0.0, %v2664
    %2666 = vmatmul.bf16.gmra.mxu0 %v1733
    %v2667 = vpop.f32.mrf.mxu0
    %v2668 = vadd.f32 0.0, %v2667
    %v2669 = vpop.f32.mrf.mxu0
    %v2670 = vadd.f32 0.0, %v2669
    %2671 = vmatmul.bf16.gmra.mxu0 %v1741
    %v2672 = vpop.f32.mrf.mxu0
    %v2673 = vadd.f32 0.0, %v2672
    %v2674 = vpop.f32.mrf.mxu0
    %v2675 = vadd.f32 0.0, %v2674
    %2676 = vmatmul.bf16.gmra.mxu0 %v1749
    %v2677 = vpop.f32.mrf.mxu0
    %v2678 = vadd.f32 0.0, %v2677
    %v2679 = vpop.f32.mrf.mxu0
    %2680 = vdwg.mxu0
    %2681 = vmatpush.bf16.msra.mxu0 %v2204
    %2682 = vmatpush.bf16.msra.mxu0 %v2202
    %2683 = vmatpush.bf16.msra.mxu0 %v2200
    %2684 = vmatpush.bf16.msra.mxu0 %v2198
    %2685 = vmatpush.bf16.msra.mxu0 %v2196
    %2686 = vmatpush.bf16.msra.mxu0 %v2194
    %2687 = vmatpush.bf16.msra.mxu0 %v2192
    %2688 = vmatpush.bf16.msra.mxu0 %v2190
    %2689 = vmatmul.bf16.gmra.mxu0 %v1726
    %v2690 = vpop.f32.mrf.mxu0
    %v2691 = vadd.f32 %v2663, %v2690
    %v2692 = vpop.f32.mrf.mxu0
    %v2693 = vadd.f32 %v2665, %v2692
    %2694 = vmatmul.bf16.gmra.mxu0 %v1734
    %v2695 = vpop.f32.mrf.mxu0
    %v2696 = vadd.f32 %v2668, %v2695
    %v2697 = vpop.f32.mrf.mxu0
    %v2698 = vadd.f32 %v2670, %v2697
    %2699 = vmatmul.bf16.gmra.mxu0 %v1742
    %v2700 = vpop.f32.mrf.mxu0
    %v2701 = vadd.f32 %v2673, %v2700
    %v2702 = vpop.f32.mrf.mxu0
    %v2703 = vadd.f32 %v2675, %v2702
    %2704 = vmatmul.bf16.gmra.mxu0 %v1750
    %v2705 = vpop.f32.mrf.mxu0
    %v2706 = vadd.f32 %v2678, %v2705
    %v2707 = vpop.f32.mrf.mxu0
    %2708 = vdwg.mxu0
    %2709 = vmatpush.bf16.msra.mxu0 %v2220
    %2710 = vmatpush.bf16.msra.mxu0 %v2218
    %2711 = vmatpush.bf16.msra.mxu0 %v2216
    %2712 = vmatpush.bf16.msra.mxu0 %v2214
    %2713 = vmatpush.bf16.msra.mxu0 %v2212
    %2714 = vmatpush.bf16.msra.mxu0 %v2210
    %2715 = vmatpush.bf16.msra.mxu0 %v2208
    %2716 = vmatpush.bf16.msra.mxu0 %v2206
    %2717 = vmatmul.bf16.gmra.mxu0 %v1727
    %v2718 = vpop.f32.mrf.mxu0
    %v2719 = vadd.f32 %v2691, %v2718
    %v2720 = vpop.f32.mrf.mxu0
    %v2721 = vadd.f32 %v2693, %v2720
    %2722 = vmatmul.bf16.gmra.mxu0 %v1735
    %v2723 = vpop.f32.mrf.mxu0
    %v2724 = vadd.f32 %v2696, %v2723
    %v2725 = vpop.f32.mrf.mxu0
    %v2726 = vadd.f32 %v2698, %v2725
    %2727 = vmatmul.bf16.gmra.mxu0 %v1743
    %v2728 = vpop.f32.mrf.mxu0
    %v2729 = vadd.f32 %v2701, %v2728
    %v2730 = vpop.f32.mrf.mxu0
    %v2731 = vadd.f32 %v2703, %v2730
    %2732 = vmatmul.bf16.gmra.mxu0 %v1751
    %v2733 = vpop.f32.mrf.mxu0
    %v2734 = vadd.f32 %v2706, %v2733
    %v2735 = vpop.f32.mrf.mxu0
    %2736 = vdwg.mxu0
    %2737 = vmatpush.bf16.msra.mxu0 %v2236
    %2738 = vmatpush.bf16.msra.mxu0 %v2234
    %2739 = vmatpush.bf16.msra.mxu0 %v2232
    %2740 = vmatpush.bf16.msra.mxu0 %v2230
    %2741 = vmatpush.bf16.msra.mxu0 %v2228
    %2742 = vmatpush.bf16.msra.mxu0 %v2226
    %2743 = vmatpush.bf16.msra.mxu0 %v2224
    %2744 = vmatpush.bf16.msra.mxu0 %v2222
    %2745 = vmatmul.bf16.gmra.mxu0 %v1728
    %v2746 = vpop.f32.mrf.mxu0
    %v2747 = vadd.f32 %v2719, %v2746
    %v2748 = vpop.f32.mrf.mxu0
    %v2749 = vadd.f32 %v2721, %v2748
    %2750 = vmatmul.bf16.gmra.mxu0 %v1736
    %v2751 = vpop.f32.mrf.mxu0
    %v2752 = vadd.f32 %v2724, %v2751
    %v2753 = vpop.f32.mrf.mxu0
    %v2754 = vadd.f32 %v2726, %v2753
    %2755 = vmatmul.bf16.gmra.mxu0 %v1744
    %v2756 = vpop.f32.mrf.mxu0
    %v2757 = vadd.f32 %v2729, %v2756
    %v2758 = vpop.f32.mrf.mxu0
    %v2759 = vadd.f32 %v2731, %v2758
    %2760 = vmatmul.bf16.gmra.mxu0 %v1752
    %v2761 = vpop.f32.mrf.mxu0
    %v2762 = vadd.f32 %v2734, %v2761
    %v2763 = vpop.f32.mrf.mxu0
    %2764 = vdwg.mxu0
    %2765 = vmatpush.bf16.msra.mxu0 %v2252
    %2766 = vmatpush.bf16.msra.mxu0 %v2250
    %2767 = vmatpush.bf16.msra.mxu0 %v2248
    %2768 = vmatpush.bf16.msra.mxu0 %v2246
    %2769 = vmatpush.bf16.msra.mxu0 %v2244
    %2770 = vmatpush.bf16.msra.mxu0 %v2242
    %2771 = vmatpush.bf16.msra.mxu0 %v2240
    %2772 = vmatpush.bf16.msra.mxu0 %v2238
    %2773 = vmatmul.bf16.gmra.mxu0 %v1729
    %v2774 = vpop.f32.mrf.mxu0
    %v2775 = vadd.f32 %v2747, %v2774
    %v2776 = vpop.f32.mrf.mxu0
    %v2777 = vadd.f32 %v2749, %v2776
    %2778 = vmatmul.bf16.gmra.mxu0 %v1737
    %v2779 = vpop.f32.mrf.mxu0
    %v2780 = vadd.f32 %v2752, %v2779
    %v2781 = vpop.f32.mrf.mxu0
    %v2782 = vadd.f32 %v2754, %v2781
    %2783 = vmatmul.bf16.gmra.mxu0 %v1745
    %v2784 = vpop.f32.mrf.mxu0
    %v2785 = vadd.f32 %v2757, %v2784
    %v2786 = vpop.f32.mrf.mxu0
    %v2787 = vadd.f32 %v2759, %v2786
    %2788 = vmatmul.bf16.gmra.mxu0 %v1753
    %v2789 = vpop.f32.mrf.mxu0
    %v2790 = vadd.f32 %v2762, %v2789
    %v2791 = vpop.f32.mrf.mxu0
    %2792 = vdwg.mxu0
    %2793 = vmatpush.bf16.msra.mxu0 %v2268
    %2794 = vmatpush.bf16.msra.mxu0 %v2266
    %2795 = vmatpush.bf16.msra.mxu0 %v2264
    %2796 = vmatpush.bf16.msra.mxu0 %v2262
    %2797 = vmatpush.bf16.msra.mxu0 %v2260
    %2798 = vmatpush.bf16.msra.mxu0 %v2258
    %2799 = vmatpush.bf16.msra.mxu0 %v2256
    %2800 = vmatpush.bf16.msra.mxu0 %v2254
    %2801 = vmatmul.bf16.gmra.mxu0 %v1730
    %v2802 = vpop.f32.mrf.mxu0
    %v2803 = vadd.f32 %v2775, %v2802
    %v2804 = vpop.f32.mrf.mxu0
    %v2805 = vadd.f32 %v2777, %v2804
    %2806 = vmatmul.bf16.gmra.mxu0 %v1738
    %v2807 = vpop.f32.mrf.mxu0
    %v2808 = vadd.f32 %v2780, %v2807
    %v2809 = vpop.f32.mrf.mxu0
    %v2810 = vadd.f32 %v2782, %v2809
    %2811 = vmatmul.bf16.gmra.mxu0 %v1746
    %v2812 = vpop.f32.mrf.mxu0
    %v2813 = vadd.f32 %v2785, %v2812
    %v2814 = vpop.f32.mrf.mxu0
    %v2815 = vadd.f32 %v2787, %v2814
    %2816 = vmatmul.bf16.gmra.mxu0 %v1754
    %v2817 = vpop.f32.mrf.mxu0
    %v2818 = vadd.f32 %v2790, %v2817
    %v2819 = vpop.f32.mrf.mxu0
    %2820 = vdwg.mxu0
    %2821 = vmatpush.bf16.msra.mxu0 %v2284
    %2822 = vmatpush.bf16.msra.mxu0 %v2282
    %2823 = vmatpush.bf16.msra.mxu0 %v2280
    %2824 = vmatpush.bf16.msra.mxu0 %v2278
    %2825 = vmatpush.bf16.msra.mxu0 %v2276
    %2826 = vmatpush.bf16.msra.mxu0 %v2274
    %2827 = vmatpush.bf16.msra.mxu0 %v2272
    %2828 = vmatpush.bf16.msra.mxu0 %v2270
    %2829 = vmatmul.bf16.gmra.mxu0 %v1731
    %v2830 = vpop.f32.mrf.mxu0
    %v2831 = vadd.f32 %v2803, %v2830
    %v2832 = vpop.f32.mrf.mxu0
    %v2833 = vadd.f32 %v2805, %v2832
    %2834 = vmatmul.bf16.gmra.mxu0 %v1739
    %v2835 = vpop.f32.mrf.mxu0
    %v2836 = vadd.f32 %v2808, %v2835
    %v2837 = vpop.f32.mrf.mxu0
    %v2838 = vadd.f32 %v2810, %v2837
    %2839 = vmatmul.bf16.gmra.mxu0 %v1747
    %v2840 = vpop.f32.mrf.mxu0
    %v2841 = vadd.f32 %v2813, %v2840
    %v2842 = vpop.f32.mrf.mxu0
    %v2843 = vadd.f32 %v2815, %v2842
    %2844 = vmatmul.bf16.gmra.mxu0 %v1755
    %v2845 = vpop.f32.mrf.mxu0
    %v2846 = vadd.f32 %v2818, %v2845
    %v2847 = vpop.f32.mrf.mxu0
    %2848 = vdwg.mxu0
    %2849 = vmatpush.bf16.msra.mxu0 %v2300
    %2850 = vmatpush.bf16.msra.mxu0 %v2298
    %2851 = vmatpush.bf16.msra.mxu0 %v2296
    %2852 = vmatpush.bf16.msra.mxu0 %v2294
    %2853 = vmatpush.bf16.msra.mxu0 %v2292
    %2854 = vmatpush.bf16.msra.mxu0 %v2290
    %2855 = vmatpush.bf16.msra.mxu0 %v2288
    %2856 = vmatpush.bf16.msra.mxu0 %v2286
    %2857 = vmatmul.bf16.gmra.mxu0 %v1732
    %v2858 = vpop.f32.mrf.mxu0
    %v2859 = vadd.f32 %v2831, %v2858
    %v2860 = vpop.f32.mrf.mxu0
    %v2861 = vadd.f32 %v2833, %v2860
    %2862 = vmatmul.bf16.gmra.mxu0 %v1740
    %v2863 = vpop.f32.mrf.mxu0
    %v2864 = vadd.f32 %v2836, %v2863
    %v2865 = vpop.f32.mrf.mxu0
    %v2866 = vadd.f32 %v2838, %v2865
    %2867 = vmatmul.bf16.gmra.mxu0 %v1748
    %v2868 = vpop.f32.mrf.mxu0
    %v2869 = vadd.f32 %v2841, %v2868
    %v2870 = vpop.f32.mrf.mxu0
    %v2871 = vadd.f32 %v2843, %v2870
    %2872 = vmatmul.bf16.gmra.mxu0 %v1756
    %v2873 = vpop.f32.mrf.mxu0
    %v2874 = vadd.f32 %v2846, %v2873
    %v2875 = vpop.f32.mrf.mxu0
    %2876 = vdwg.mxu0
    %v2877 = vadd.f32 %v1499, %v2635
    %v2878 = vadd.f32 %v1500, %v2859
    %v2879 = vadd.f32 %v1501, %v2637
    %v2880 = vadd.f32 %v1502, %v2861
    %v2881 = vadd.f32 %v1503, %v2640
    %v2882 = vadd.f32 %v1504, %v2864
    %v2883 = vadd.f32 %v1505, %v2642
    %v2884 = vadd.f32 %v1506, %v2866
    %v2885 = vadd.f32 %v1507, %v2645
    %v2886 = vadd.f32 %v1508, %v2869
    %v2887 = vadd.f32 %v1509, %v2647
    %v2888 = vadd.f32 %v1510, %v2871
    %v2889 = vadd.f32 %v1511, %v2650
    %v2890 = vadd.f32 %v1512, %v2874
    %2891 = vst [vmem:[#allocation10] sm:$0xff] %v2877
    %2892 = vst [vmem:[#allocation10 + $0x8] sm:$0xff] %v2878
    %2893 = vst [vmem:[#allocation10 + $0x10] sm:$0xff] %v2879
    %2894 = vst [vmem:[#allocation10 + $0x18] sm:$0xff] %v2880
    %2895 = vst [vmem:[#allocation10 + $0x20] sm:$0xff] %v2881
    %2896 = vst [vmem:[#allocation10 + $0x28] sm:$0xff] %v2882
    %2897 = vst [vmem:[#allocation10 + $0x30] sm:$0xff] %v2883
    %2898 = vst [vmem:[#allocation10 + $0x38] sm:$0xff] %v2884
    %2899 = vst [vmem:[#allocation10 + $0x40] sm:$0xff] %v2885
    %2900 = vst [vmem:[#allocation10 + $0x48] sm:$0xff] %v2886
    %2901 = vst [vmem:[#allocation10 + $0x50] sm:$0xff] %v2887
    %2902 = vst [vmem:[#allocation10 + $0x58] sm:$0xff] %v2888
    %2903 = vst [vmem:[#allocation10 + $0x60] sm:$0xff] %v2889
    %2904 = vst [vmem:[#allocation10 + $0x68] sm:$0xff] %v2890
    // Predicated region
    $region42: #{tpu_custom_call.1} parent=1 // pred_check
      _
    $region43: #{tpu_custom_call.1} parent=1 // pred_check_branch
      %2906 = sbr.rel (0) target = $region45
    $region44: #{tpu_custom_call.1} parent=1 // pred_region
      %2908 = vsyncadd [#allocation4], 0
      %s2909 = sshll.u32 [#allocation10], 4
      %s2910 = int_to_ptr.vmem [resolvable:$true] %s2909
      %s2911 = sshll.u32 %s5, 4
      %s2912 = int_to_ptr.hbm [resolvable:$true] %s2911
      %2917 = dma.vmem_to_hbm [thread:$0]  %s2910, 1792, %s2912, [#allocation4], 256, 256, 16
    $region45: #{tpu_custom_call.1} parent=1 // pred_fallthru
      _
    // Predicated region
    $region46: #{tpu_custom_call.1} parent=1 // pred_check
      _
    $region47: #{tpu_custom_call.1} parent=1 // pred_check_branch
      %2919 = sbr.rel (0) target = $region49
    $region48: #{tpu_custom_call.1} parent=1 // pred_region
      %2921 = vsyncadd [#allocation12], 0
      %s2922 = sshll.u32 [#allocation11], 4
      %s2923 = int_to_ptr.vmem [resolvable:$true] %s2922
      %s2924 = sshll.u32 %s6, 4
      %s2925 = int_to_ptr.hbm [resolvable:$true] %s2924
      %2930 = dma.vmem_to_hbm [thread:$0]  %s2923, 3584, %s2925, [#allocation12], 512, 512, 32
    $region49: #{tpu_custom_call.1} parent=1 // pred_fallthru
      _
    // Predicated region
    $region50: #{tpu_custom_call.1} parent=1 // pred_check
      _
    $region51: #{tpu_custom_call.1} parent=1 // pred_check_branch
      %2932 = sbr.rel (0) target = $region53
    $region52: #{tpu_custom_call.1} parent=1 // pred_region
      %2934 = dma.done [#allocation4], 1792
    $region53: #{tpu_custom_call.1} parent=1 // pred_fallthru
      _
    // Predicated region
    $region54: #{tpu_custom_call.1} parent=1 // pred_check
      _
    $region55: #{tpu_custom_call.1} parent=1 // pred_check_branch
      %2936 = sbr.rel (0) target = $region57
    $region56: #{tpu_custom_call.1} parent=1 // pred_region
      %2938 = dma.done [#allocation12], 3584
    $region57: #{tpu_custom_call.1} parent=1 // pred_fallthru
      _
    %2939 = vsyncpa [#allocation3], 1
    %2940 = vsyncpa [#allocation6], 1
    %2941 = vsyncpa [#allocation9], 1
    %2942 = vsyncpa [#allocation4], 1
    %2943 = vsyncpa [#allocation12], 1

</llo_original>
